<compile_context>
chip_gen: v5e
topology: v5e:2x2
jax: 0.10.0
libtpu: 0.0.40
codegen_flags: <defaults>
</compile_context>

<pallas_src>
import functools
import math

import jax
import jax.numpy as jnp
from jax import lax
from jax.experimental import pallas as pl
from jax.experimental.pallas import tpu as pltpu


_VMEM_OUT_BUDGET = 24 * 1024 * 1024    # double-buffered output block budget (v7x-safe)
_MAX_TOKENS_PER_CALL = 32768           # SMEM scalar-prefetch ceiling per pallas_call
_TARGET_INFLIGHT_ROWS = 64             # outstanding row DMAs (depth * group)


def _group_for_dtype(dtype) -> int:
    """Rows per gather group: one full packed-sublane tile per store."""
    itemsize = jnp.dtype(dtype).itemsize
    return {4: 8, 2: 16, 1: 32}.get(itemsize, 8)


def _embed_gather_kernel(ids_ref, table_ref, out_ref, sem, *,
                         scale: float, block_tokens: int, group: int, depth: int):
    """Gather `block_tokens` embedding rows HBM -> out_ref and scale in place.

    ids_ref:   SMEM (n_tok_pad,) int32       -- scalar-prefetched token ids
    table_ref: HBM  (V, D)                   -- embedding table (stays in HBM)
    out_ref:   VMEM (block_tokens, D)        -- output block (DMA landing buffer)
    sem:       DMA semaphores (depth, group) -- per-row, slot-recycled
    """
    base = pl.program_id(0) * block_tokens
    n_groups = block_tokens // group           # static

    def start_group(g):
        slot = g % depth
        off = g * group
        for r in range(group):
            tok = ids_ref[base + off + r]
            pltpu.make_async_copy(
                table_ref.at[pl.ds(tok, 1), :],
                out_ref.at[pl.ds(off + r, 1), :],
                sem.at[slot, r],
            ).start()

    def wait_group(g):
        slot = g % depth
        off = g * group
        for r in range(group):
            # Dummy src (shape-only); dst matches the real landing slice.
            pltpu.make_async_copy(
                table_ref.at[pl.ds(0, 1), :],
                out_ref.at[pl.ds(off + r, 1), :],
                sem.at[slot, r],
            ).wait()

    # Prime the pipeline: up to `depth` groups in flight.
    for g in range(min(depth, n_groups)):
        start_group(g)

    def body(g, carry):
        # Wait for group g (frees its semaphore slot), then immediately refill
        # the pipeline with group g + depth (same slot, now safe to reuse).
        wait_group(g)

        @pl.when(g + depth < n_groups)
        def _():
            start_group(g + depth)

        # Scale the landed rows in place (f32 accumulate for sub-f32 tables).
        off = pl.multiple_of(g * group, group)
        rows = out_ref[pl.ds(off, group), :]
        out_ref[pl.ds(off, group), :] = (
            rows.astype(jnp.float32) * scale).astype(out_ref.dtype)
        return carry

    lax.fori_loop(0, n_groups, body, 0, unroll=2)


def _gather_chunk(ids, table, *, block_tokens, group, depth, scale):
    """One pallas_call over a flat chunk of token ids. Returns (len(ids), D)."""
    n = ids.shape[0]
    v, d = table.shape
    n_blocks = pl.cdiv(n, block_tokens)
    n_pad = n_blocks * block_tokens
    if n_pad != n:
        ids = jnp.pad(ids, (0, n_pad - n))

    row_bytes = d * jnp.dtype(table.dtype).itemsize
    # Output block is double-buffered by the pipeline; size the scoped VMEM
    # limit explicitly (stays well under v7x's 64 MiB physical VMEM).
    vmem_limit = int(min(100 * 2**20,
                         max(16 * 2**20, 2 * block_tokens * row_bytes + (4 << 20))))

    kernel = functools.partial(_embed_gather_kernel, scale=scale,
                               block_tokens=block_tokens, group=group, depth=depth)

    cost = pl.CostEstimate(
        flops=2 * n_pad * d,                       # just the in-place scale
        transcendentals=0,
        bytes_accessed=2 * n_pad * row_bytes + n_pad * 4)

    out = pl.pallas_call(
        kernel,
        out_shape=jax.ShapeDtypeStruct((n_pad, d), table.dtype),
        grid_spec=pltpu.PrefetchScalarGridSpec(
            num_scalar_prefetch=1,                 # ids -> SMEM
            grid=(n_blocks,),
            in_specs=[pl.BlockSpec(memory_space=pl.ANY)],   # table stays in HBM
            out_specs=pl.BlockSpec((block_tokens, d), lambda i, ids: (i, 0)),
            scratch_shapes=[pltpu.SemaphoreType.DMA((depth, group))]),
        compiler_params=pltpu.CompilerParams(
            dimension_semantics=("parallel",),     # v7x: split blocks across TCs
            vmem_limit_bytes=vmem_limit),
        cost_estimate=cost,
    )(ids, table)

    if n_pad != n:
        out = out[:n]
    return out


def input_embedding(token_ids: jax.Array, table: jax.Array,
                    *, block_tokens: int = 512) -> jax.Array:
    """token_ids: (B, S) int; table: (V, D) float -> (B, S, D) float.

    Matches `nn.Embedding(V, D)(x) * sqrt(D)`. Out-of-range / negative ids are
    clamped into [0, V-1].
    """
    b, s = token_ids.shape
    v, d = table.shape
    dtype = table.dtype
    scale = math.sqrt(d)                     # scale uses the *original* d_model

    group = _group_for_dtype(dtype)
    depth = max(2, _TARGET_INFLIGHT_ROWS // group)

    n_tok = b * s
    row_bytes = d * jnp.dtype(dtype).itemsize

    # Clamp the token block: VMEM budget (double-buffered output) and don't
    # over-pad tiny inputs. Always a positive multiple of `group`.
    max_bt = max(group, (_VMEM_OUT_BUDGET // (2 * row_bytes)) // group * group)
    bt = min(block_tokens, max_bt)
    bt = min(bt, ((n_tok + group - 1) // group) * group)
    bt = max(group, (bt // group) * group)

    # Clamp ids so the row DMA can never read out of bounds.
    ids_flat = jnp.clip(token_ids.reshape(-1).astype(jnp.int32), 0, v - 1)

    # Chunk ids so the 1-D SMEM scalar-prefetch buffer stays within SMEM limits.
    chunks = []
    for start in range(0, n_tok, _MAX_TOKENS_PER_CALL):
        ids_chunk = ids_flat[start:start + _MAX_TOKENS_PER_CALL]
        chunks.append(_gather_chunk(ids_chunk, table, block_tokens=bt,
                                    group=group, depth=depth, scale=scale))
    out_flat = chunks[0] if len(chunks) == 1 else jnp.concatenate(chunks, axis=0)
    return out_flat.reshape(b, s, d)


if __name__ == "__main__":
    # Small, deterministic configuration consistent with the module.
    d_model = 128             # lane-dense hidden size (multiple of 128)
    vocab_size = 1000
    batch, seq = 2, 8

    key = jax.random.PRNGKey(0)
    k_tab, k_ids = jax.random.split(key)

    # Deterministic "parameter init" for nn.Embedding(vocab_size, d_model):
    # standard normal weights, like PyTorch's default.
    embed_table = jax.random.normal(k_tab, (vocab_size, d_model), dtype=jnp.float32)
    token_ids = jax.random.randint(k_ids, (batch, seq), 0, vocab_size, dtype=jnp.int32)

    out = jax.block_until_ready(input_embedding(token_ids, embed_table))
    ref = embed_table[token_ids] * math.sqrt(d_model)
    assert out.shape == (batch, seq, d_model)
    assert jnp.allclose(out, ref, atol=1e-5, rtol=1e-5)

    # Also exercise a non-128-multiple D (no table padding, ragged lane dim).
    d_small, v_small = 32, 64
    k_tab2, k_ids2 = jax.random.split(jax.random.PRNGKey(0))
    table2 = jax.random.normal(k_tab2, (v_small, d_small), dtype=jnp.float32)
    ids2 = jax.random.randint(k_ids2, (batch, seq), 0, v_small, dtype=jnp.int32)
    out2 = jax.block_until_ready(input_embedding(ids2, table2))
    ref2 = table2[ids2] * math.sqrt(d_small)
    assert out2.shape == (batch, seq, d_small)
    assert jnp.allclose(out2, ref2, atol=1e-5, rtol=1e-5)

    # bf16 table path (dtype-aware group=16, f32-accumulated scale).
    table3 = embed_table.astype(jnp.bfloat16)
    out3 = jax.block_until_ready(input_embedding(token_ids, table3))
    ref3 = (table3[token_ids].astype(jnp.float32) * math.sqrt(d_model)).astype(jnp.bfloat16)
    assert out3.dtype == jnp.bfloat16
    assert jnp.allclose(out3.astype(jnp.float32), ref3.astype(jnp.float32),
                        atol=1e-2, rtol=1e-2)

    print("KERNEL_OK")
</pallas_src>

<mosaic_0001>
module attributes {stable_mosaic.version = 11 : i64} {
  func.func @_embed_gather_kernel(%arg0: i32, %arg1: memref<16xi32, #tpu.memory_space<smem>>, %arg2: memref<1000x128xf32, #tpu.memory_space<any>>, %arg3: memref<16x128xf32, #tpu.memory_space<vmem>>, %arg4: memref<8x8x!tpu.dma_semaphore, #tpu.memory_space<semaphore_mem>>) attributes {dimension_semantics = [#tpu.dimension_semantics<parallel>], iteration_bounds = array<i64: 1>, scalar_prefetch = 1 : i64, scratch_operands = 1 : i64, tpu.core_type = #tpu.core_type<tc>, window_params = [{}, {transform_indices = @transform_1, window_bounds = array<i64: 16, 128>}]} {
    %c16_i32 = arith.constant 16 : i32
    %0 = arith.muli %arg0, %c16_i32 : i32
    %c0_i32 = arith.constant 0 : i32
    %1 = arith.addi %0, %c0_i32 : i32
    %c0_i32_0 = arith.constant 0 : i32
    %2 = arith.addi %1, %c0_i32_0 : i32
    %3 = arith.index_cast %2 : i32 to index
    %4 = memref.load %arg1[%3] : memref<16xi32, #tpu.memory_space<smem>>
    %c0_i32_1 = arith.constant 0 : i32
    %c0_i32_2 = arith.constant 0 : i32
    %c0_i32_3 = arith.constant 0 : i32
    %5 = tpu.memref_slice %arg2[%4, %c0_i32_3] : memref<1000x128xf32, #tpu.memory_space<any>> -> memref<1x128xf32, #tpu.memory_space<any>>
    %c0_i32_4 = arith.constant 0 : i32
    %c0_i32_5 = arith.constant 0 : i32
    %6 = tpu.memref_slice %arg3[%c0_i32_4, %c0_i32_5] : memref<16x128xf32, #tpu.memory_space<vmem>> -> memref<1x128xf32, #tpu.memory_space<vmem>>
    %7 = tpu.memref_slice %arg4[%c0_i32_1, %c0_i32_2] : memref<8x8x!tpu.dma_semaphore, #tpu.memory_space<semaphore_mem>> -> memref<1x1x!tpu.dma_semaphore, #tpu.memory_space<semaphore_mem>>
    %8 = tpu.memref_squeeze %7 : memref<1x1x!tpu.dma_semaphore, #tpu.memory_space<semaphore_mem>> -> memref<!tpu.dma_semaphore, #tpu.memory_space<semaphore_mem>>
    tpu.enqueue_dma source(%5 : memref<1x128xf32, #tpu.memory_space<any>>) target(%6 : memref<1x128xf32, #tpu.memory_space<vmem>>) target_semaphore(%8 : memref<!tpu.dma_semaphore, #tpu.memory_space<semaphore_mem>>)
    %c0_i32_6 = arith.constant 0 : i32
    %9 = arith.addi %0, %c0_i32_6 : i32
    %c1_i32 = arith.constant 1 : i32
    %10 = arith.addi %9, %c1_i32 : i32
    %11 = arith.index_cast %10 : i32 to index
    %12 = memref.load %arg1[%11] : memref<16xi32, #tpu.memory_space<smem>>
    %c0_i32_7 = arith.constant 0 : i32
    %c1_i32_8 = arith.constant 1 : i32
    %c0_i32_9 = arith.constant 0 : i32
    %13 = tpu.memref_slice %arg2[%12, %c0_i32_9] : memref<1000x128xf32, #tpu.memory_space<any>> -> memref<1x128xf32, #tpu.memory_space<any>>
    %c1_i32_10 = arith.constant 1 : i32
    %c0_i32_11 = arith.constant 0 : i32
    %14 = tpu.memref_slice %arg3[%c1_i32_10, %c0_i32_11] : memref<16x128xf32, #tpu.memory_space<vmem>> -> memref<1x128xf32, #tpu.memory_space<vmem>>
    %15 = tpu.memref_slice %arg4[%c0_i32_7, %c1_i32_8] : memref<8x8x!tpu.dma_semaphore, #tpu.memory_space<semaphore_mem>> -> memref<1x1x!tpu.dma_semaphore, #tpu.memory_space<semaphore_mem>>
    %16 = tpu.memref_squeeze %15 : memref<1x1x!tpu.dma_semaphore, #tpu.memory_space<semaphore_mem>> -> memref<!tpu.dma_semaphore, #tpu.memory_space<semaphore_mem>>
    tpu.enqueue_dma source(%13 : memref<1x128xf32, #tpu.memory_space<any>>) target(%14 : memref<1x128xf32, #tpu.memory_space<vmem>>) target_semaphore(%16 : memref<!tpu.dma_semaphore, #tpu.memory_space<semaphore_mem>>)
    %c0_i32_12 = arith.constant 0 : i32
    %17 = arith.addi %0, %c0_i32_12 : i32
    %c2_i32 = arith.constant 2 : i32
    %18 = arith.addi %17, %c2_i32 : i32
    %19 = arith.index_cast %18 : i32 to index
    %20 = memref.load %arg1[%19] : memref<16xi32, #tpu.memory_space<smem>>
    %c0_i32_13 = arith.constant 0 : i32
    %c2_i32_14 = arith.constant 2 : i32
    %c0_i32_15 = arith.constant 0 : i32
    %21 = tpu.memref_slice %arg2[%20, %c0_i32_15] : memref<1000x128xf32, #tpu.memory_space<any>> -> memref<1x128xf32, #tpu.memory_space<any>>
    %c2_i32_16 = arith.constant 2 : i32
    %c0_i32_17 = arith.constant 0 : i32
    %22 = tpu.memref_slice %arg3[%c2_i32_16, %c0_i32_17] : memref<16x128xf32, #tpu.memory_space<vmem>> -> memref<1x128xf32, #tpu.memory_space<vmem>>
    %23 = tpu.memref_slice %arg4[%c0_i32_13, %c2_i32_14] : memref<8x8x!tpu.dma_semaphore, #tpu.memory_space<semaphore_mem>> -> memref<1x1x!tpu.dma_semaphore, #tpu.memory_space<semaphore_mem>>
    %24 = tpu.memref_squeeze %23 : memref<1x1x!tpu.dma_semaphore, #tpu.memory_space<semaphore_mem>> -> memref<!tpu.dma_semaphore, #tpu.memory_space<semaphore_mem>>
    tpu.enqueue_dma source(%21 : memref<1x128xf32, #tpu.memory_space<any>>) target(%22 : memref<1x128xf32, #tpu.memory_space<vmem>>) target_semaphore(%24 : memref<!tpu.dma_semaphore, #tpu.memory_space<semaphore_mem>>)
    %c0_i32_18 = arith.constant 0 : i32
    %25 = arith.addi %0, %c0_i32_18 : i32
    %c3_i32 = arith.constant 3 : i32
    %26 = arith.addi %25, %c3_i32 : i32
    %27 = arith.index_cast %26 : i32 to index
    %28 = memref.load %arg1[%27] : memref<16xi32, #tpu.memory_space<smem>>
    %c0_i32_19 = arith.constant 0 : i32
    %c3_i32_20 = arith.constant 3 : i32
    %c0_i32_21 = arith.constant 0 : i32
    %29 = tpu.memref_slice %arg2[%28, %c0_i32_21] : memref<1000x128xf32, #tpu.memory_space<any>> -> memref<1x128xf32, #tpu.memory_space<any>>
    %c3_i32_22 = arith.constant 3 : i32
    %c0_i32_23 = arith.constant 0 : i32
    %30 = tpu.memref_slice %arg3[%c3_i32_22, %c0_i32_23] : memref<16x128xf32, #tpu.memory_space<vmem>> -> memref<1x128xf32, #tpu.memory_space<vmem>>
    %31 = tpu.memref_slice %arg4[%c0_i32_19, %c3_i32_20] : memref<8x8x!tpu.dma_semaphore, #tpu.memory_space<semaphore_mem>> -> memref<1x1x!tpu.dma_semaphore, #tpu.memory_space<semaphore_mem>>
    %32 = tpu.memref_squeeze %31 : memref<1x1x!tpu.dma_semaphore, #tpu.memory_space<semaphore_mem>> -> memref<!tpu.dma_semaphore, #tpu.memory_space<semaphore_mem>>
    tpu.enqueue_dma source(%29 : memref<1x128xf32, #tpu.memory_space<any>>) target(%30 : memref<1x128xf32, #tpu.memory_space<vmem>>) target_semaphore(%32 : memref<!tpu.dma_semaphore, #tpu.memory_space<semaphore_mem>>)
    %c0_i32_24 = arith.constant 0 : i32
    %33 = arith.addi %0, %c0_i32_24 : i32
    %c4_i32 = arith.constant 4 : i32
    %34 = arith.addi %33, %c4_i32 : i32
    %35 = arith.index_cast %34 : i32 to index
    %36 = memref.load %arg1[%35] : memref<16xi32, #tpu.memory_space<smem>>
    %c0_i32_25 = arith.constant 0 : i32
    %c4_i32_26 = arith.constant 4 : i32
    %c0_i32_27 = arith.constant 0 : i32
    %37 = tpu.memref_slice %arg2[%36, %c0_i32_27] : memref<1000x128xf32, #tpu.memory_space<any>> -> memref<1x128xf32, #tpu.memory_space<any>>
    %c4_i32_28 = arith.constant 4 : i32
    %c0_i32_29 = arith.constant 0 : i32
    %38 = tpu.memref_slice %arg3[%c4_i32_28, %c0_i32_29] : memref<16x128xf32, #tpu.memory_space<vmem>> -> memref<1x128xf32, #tpu.memory_space<vmem>>
    %39 = tpu.memref_slice %arg4[%c0_i32_25, %c4_i32_26] : memref<8x8x!tpu.dma_semaphore, #tpu.memory_space<semaphore_mem>> -> memref<1x1x!tpu.dma_semaphore, #tpu.memory_space<semaphore_mem>>
    %40 = tpu.memref_squeeze %39 : memref<1x1x!tpu.dma_semaphore, #tpu.memory_space<semaphore_mem>> -> memref<!tpu.dma_semaphore, #tpu.memory_space<semaphore_mem>>
    tpu.enqueue_dma source(%37 : memref<1x128xf32, #tpu.memory_space<any>>) target(%38 : memref<1x128xf32, #tpu.memory_space<vmem>>) target_semaphore(%40 : memref<!tpu.dma_semaphore, #tpu.memory_space<semaphore_mem>>)
    %c0_i32_30 = arith.constant 0 : i32
    %41 = arith.addi %0, %c0_i32_30 : i32
    %c5_i32 = arith.constant 5 : i32
    %42 = arith.addi %41, %c5_i32 : i32
    %43 = arith.index_cast %42 : i32 to index
    %44 = memref.load %arg1[%43] : memref<16xi32, #tpu.memory_space<smem>>
    %c0_i32_31 = arith.constant 0 : i32
    %c5_i32_32 = arith.constant 5 : i32
    %c0_i32_33 = arith.constant 0 : i32
    %45 = tpu.memref_slice %arg2[%44, %c0_i32_33] : memref<1000x128xf32, #tpu.memory_space<any>> -> memref<1x128xf32, #tpu.memory_space<any>>
    %c5_i32_34 = arith.constant 5 : i32
    %c0_i32_35 = arith.constant 0 : i32
    %46 = tpu.memref_slice %arg3[%c5_i32_34, %c0_i32_35] : memref<16x128xf32, #tpu.memory_space<vmem>> -> memref<1x128xf32, #tpu.memory_space<vmem>>
    %47 = tpu.memref_slice %arg4[%c0_i32_31, %c5_i32_32] : memref<8x8x!tpu.dma_semaphore, #tpu.memory_space<semaphore_mem>> -> memref<1x1x!tpu.dma_semaphore, #tpu.memory_space<semaphore_mem>>
    %48 = tpu.memref_squeeze %47 : memref<1x1x!tpu.dma_semaphore, #tpu.memory_space<semaphore_mem>> -> memref<!tpu.dma_semaphore, #tpu.memory_space<semaphore_mem>>
    tpu.enqueue_dma source(%45 : memref<1x128xf32, #tpu.memory_space<any>>) target(%46 : memref<1x128xf32, #tpu.memory_space<vmem>>) target_semaphore(%48 : memref<!tpu.dma_semaphore, #tpu.memory_space<semaphore_mem>>)
    %c0_i32_36 = arith.constant 0 : i32
    %49 = arith.addi %0, %c0_i32_36 : i32
    %c6_i32 = arith.constant 6 : i32
    %50 = arith.addi %49, %c6_i32 : i32
    %51 = arith.index_cast %50 : i32 to index
    %52 = memref.load %arg1[%51] : memref<16xi32, #tpu.memory_space<smem>>
    %c0_i32_37 = arith.constant 0 : i32
    %c6_i32_38 = arith.constant 6 : i32
    %c0_i32_39 = arith.constant 0 : i32
    %53 = tpu.memref_slice %arg2[%52, %c0_i32_39] : memref<1000x128xf32, #tpu.memory_space<any>> -> memref<1x128xf32, #tpu.memory_space<any>>
    %c6_i32_40 = arith.constant 6 : i32
    %c0_i32_41 = arith.constant 0 : i32
    %54 = tpu.memref_slice %arg3[%c6_i32_40, %c0_i32_41] : memref<16x128xf32, #tpu.memory_space<vmem>> -> memref<1x128xf32, #tpu.memory_space<vmem>>
    %55 = tpu.memref_slice %arg4[%c0_i32_37, %c6_i32_38] : memref<8x8x!tpu.dma_semaphore, #tpu.memory_space<semaphore_mem>> -> memref<1x1x!tpu.dma_semaphore, #tpu.memory_space<semaphore_mem>>
    %56 = tpu.memref_squeeze %55 : memref<1x1x!tpu.dma_semaphore, #tpu.memory_space<semaphore_mem>> -> memref<!tpu.dma_semaphore, #tpu.memory_space<semaphore_mem>>
    tpu.enqueue_dma source(%53 : memref<1x128xf32, #tpu.memory_space<any>>) target(%54 : memref<1x128xf32, #tpu.memory_space<vmem>>) target_semaphore(%56 : memref<!tpu.dma_semaphore, #tpu.memory_space<semaphore_mem>>)
    %c0_i32_42 = arith.constant 0 : i32
    %57 = arith.addi %0, %c0_i32_42 : i32
    %c7_i32 = arith.constant 7 : i32
    %58 = arith.addi %57, %c7_i32 : i32
    %59 = arith.index_cast %58 : i32 to index
    %60 = memref.load %arg1[%59] : memref<16xi32, #tpu.memory_space<smem>>
    %c0_i32_43 = arith.constant 0 : i32
    %c7_i32_44 = arith.constant 7 : i32
    %c0_i32_45 = arith.constant 0 : i32
    %61 = tpu.memref_slice %arg2[%60, %c0_i32_45] : memref<1000x128xf32, #tpu.memory_space<any>> -> memref<1x128xf32, #tpu.memory_space<any>>
    %c7_i32_46 = arith.constant 7 : i32
    %c0_i32_47 = arith.constant 0 : i32
    %62 = tpu.memref_slice %arg3[%c7_i32_46, %c0_i32_47] : memref<16x128xf32, #tpu.memory_space<vmem>> -> memref<1x128xf32, #tpu.memory_space<vmem>>
    %63 = tpu.memref_slice %arg4[%c0_i32_43, %c7_i32_44] : memref<8x8x!tpu.dma_semaphore, #tpu.memory_space<semaphore_mem>> -> memref<1x1x!tpu.dma_semaphore, #tpu.memory_space<semaphore_mem>>
    %64 = tpu.memref_squeeze %63 : memref<1x1x!tpu.dma_semaphore, #tpu.memory_space<semaphore_mem>> -> memref<!tpu.dma_semaphore, #tpu.memory_space<semaphore_mem>>
    tpu.enqueue_dma source(%61 : memref<1x128xf32, #tpu.memory_space<any>>) target(%62 : memref<1x128xf32, #tpu.memory_space<vmem>>) target_semaphore(%64 : memref<!tpu.dma_semaphore, #tpu.memory_space<semaphore_mem>>)
    %c8_i32 = arith.constant 8 : i32
    %65 = arith.addi %0, %c8_i32 : i32
    %c0_i32_48 = arith.constant 0 : i32
    %66 = arith.addi %65, %c0_i32_48 : i32
    %67 = arith.index_cast %66 : i32 to index
    %68 = memref.load %arg1[%67] : memref<16xi32, #tpu.memory_space<smem>>
    %c1_i32_49 = arith.constant 1 : i32
    %c0_i32_50 = arith.constant 0 : i32
    %c0_i32_51 = arith.constant 0 : i32
    %69 = tpu.memref_slice %arg2[%68, %c0_i32_51] : memref<1000x128xf32, #tpu.memory_space<any>> -> memref<1x128xf32, #tpu.memory_space<any>>
    %c8_i32_52 = arith.constant 8 : i32
    %c0_i32_53 = arith.constant 0 : i32
    %70 = tpu.memref_slice %arg3[%c8_i32_52, %c0_i32_53] : memref<16x128xf32, #tpu.memory_space<vmem>> -> memref<1x128xf32, #tpu.memory_space<vmem>>
    %71 = tpu.memref_slice %arg4[%c1_i32_49, %c0_i32_50] : memref<8x8x!tpu.dma_semaphore, #tpu.memory_space<semaphore_mem>> -> memref<1x1x!tpu.dma_semaphore, #tpu.memory_space<semaphore_mem>>
    %72 = tpu.memref_squeeze %71 : memref<1x1x!tpu.dma_semaphore, #tpu.memory_space<semaphore_mem>> -> memref<!tpu.dma_semaphore, #tpu.memory_space<semaphore_mem>>
    tpu.enqueue_dma source(%69 : memref<1x128xf32, #tpu.memory_space<any>>) target(%70 : memref<1x128xf32, #tpu.memory_space<vmem>>) target_semaphore(%72 : memref<!tpu.dma_semaphore, #tpu.memory_space<semaphore_mem>>)
    %c8_i32_54 = arith.constant 8 : i32
    %73 = arith.addi %0, %c8_i32_54 : i32
    %c1_i32_55 = arith.constant 1 : i32
    %74 = arith.addi %73, %c1_i32_55 : i32
    %75 = arith.index_cast %74 : i32 to index
    %76 = memref.load %arg1[%75] : memref<16xi32, #tpu.memory_space<smem>>
    %c1_i32_56 = arith.constant 1 : i32
    %c1_i32_57 = arith.constant 1 : i32
    %c0_i32_58 = arith.constant 0 : i32
    %77 = tpu.memref_slice %arg2[%76, %c0_i32_58] : memref<1000x128xf32, #tpu.memory_space<any>> -> memref<1x128xf32, #tpu.memory_space<any>>
    %c9_i32 = arith.constant 9 : i32
    %c0_i32_59 = arith.constant 0 : i32
    %78 = tpu.memref_slice %arg3[%c9_i32, %c0_i32_59] : memref<16x128xf32, #tpu.memory_space<vmem>> -> memref<1x128xf32, #tpu.memory_space<vmem>>
    %79 = tpu.memref_slice %arg4[%c1_i32_56, %c1_i32_57] : memref<8x8x!tpu.dma_semaphore, #tpu.memory_space<semaphore_mem>> -> memref<1x1x!tpu.dma_semaphore, #tpu.memory_space<semaphore_mem>>
    %80 = tpu.memref_squeeze %79 : memref<1x1x!tpu.dma_semaphore, #tpu.memory_space<semaphore_mem>> -> memref<!tpu.dma_semaphore, #tpu.memory_space<semaphore_mem>>
    tpu.enqueue_dma source(%77 : memref<1x128xf32, #tpu.memory_space<any>>) target(%78 : memref<1x128xf32, #tpu.memory_space<vmem>>) target_semaphore(%80 : memref<!tpu.dma_semaphore, #tpu.memory_space<semaphore_mem>>)
    %c8_i32_60 = arith.constant 8 : i32
    %81 = arith.addi %0, %c8_i32_60 : i32
    %c2_i32_61 = arith.constant 2 : i32
    %82 = arith.addi %81, %c2_i32_61 : i32
    %83 = arith.index_cast %82 : i32 to index
    %84 = memref.load %arg1[%83] : memref<16xi32, #tpu.memory_space<smem>>
    %c1_i32_62 = arith.constant 1 : i32
    %c2_i32_63 = arith.constant 2 : i32
    %c0_i32_64 = arith.constant 0 : i32
    %85 = tpu.memref_slice %arg2[%84, %c0_i32_64] : memref<1000x128xf32, #tpu.memory_space<any>> -> memref<1x128xf32, #tpu.memory_space<any>>
    %c10_i32 = arith.constant 10 : i32
    %c0_i32_65 = arith.constant 0 : i32
    %86 = tpu.memref_slice %arg3[%c10_i32, %c0_i32_65] : memref<16x128xf32, #tpu.memory_space<vmem>> -> memref<1x128xf32, #tpu.memory_space<vmem>>
    %87 = tpu.memref_slice %arg4[%c1_i32_62, %c2_i32_63] : memref<8x8x!tpu.dma_semaphore, #tpu.memory_space<semaphore_mem>> -> memref<1x1x!tpu.dma_semaphore, #tpu.memory_space<semaphore_mem>>
    %88 = tpu.memref_squeeze %87 : memref<1x1x!tpu.dma_semaphore, #tpu.memory_space<semaphore_mem>> -> memref<!tpu.dma_semaphore, #tpu.memory_space<semaphore_mem>>
    tpu.enqueue_dma source(%85 : memref<1x128xf32, #tpu.memory_space<any>>) target(%86 : memref<1x128xf32, #tpu.memory_space<vmem>>) target_semaphore(%88 : memref<!tpu.dma_semaphore, #tpu.memory_space<semaphore_mem>>)
    %c8_i32_66 = arith.constant 8 : i32
    %89 = arith.addi %0, %c8_i32_66 : i32
    %c3_i32_67 = arith.constant 3 : i32
    %90 = arith.addi %89, %c3_i32_67 : i32
    %91 = arith.index_cast %90 : i32 to index
    %92 = memref.load %arg1[%91] : memref<16xi32, #tpu.memory_space<smem>>
    %c1_i32_68 = arith.constant 1 : i32
    %c3_i32_69 = arith.constant 3 : i32
    %c0_i32_70 = arith.constant 0 : i32
    %93 = tpu.memref_slice %arg2[%92, %c0_i32_70] : memref<1000x128xf32, #tpu.memory_space<any>> -> memref<1x128xf32, #tpu.memory_space<any>>
    %c11_i32 = arith.constant 11 : i32
    %c0_i32_71 = arith.constant 0 : i32
    %94 = tpu.memref_slice %arg3[%c11_i32, %c0_i32_71] : memref<16x128xf32, #tpu.memory_space<vmem>> -> memref<1x128xf32, #tpu.memory_space<vmem>>
    %95 = tpu.memref_slice %arg4[%c1_i32_68, %c3_i32_69] : memref<8x8x!tpu.dma_semaphore, #tpu.memory_space<semaphore_mem>> -> memref<1x1x!tpu.dma_semaphore, #tpu.memory_space<semaphore_mem>>
    %96 = tpu.memref_squeeze %95 : memref<1x1x!tpu.dma_semaphore, #tpu.memory_space<semaphore_mem>> -> memref<!tpu.dma_semaphore, #tpu.memory_space<semaphore_mem>>
    tpu.enqueue_dma source(%93 : memref<1x128xf32, #tpu.memory_space<any>>) target(%94 : memref<1x128xf32, #tpu.memory_space<vmem>>) target_semaphore(%96 : memref<!tpu.dma_semaphore, #tpu.memory_space<semaphore_mem>>)
    %c8_i32_72 = arith.constant 8 : i32
    %97 = arith.addi %0, %c8_i32_72 : i32
    %c4_i32_73 = arith.constant 4 : i32
    %98 = arith.addi %97, %c4_i32_73 : i32
    %99 = arith.index_cast %98 : i32 to index
    %100 = memref.load %arg1[%99] : memref<16xi32, #tpu.memory_space<smem>>
    %c1_i32_74 = arith.constant 1 : i32
    %c4_i32_75 = arith.constant 4 : i32
    %c0_i32_76 = arith.constant 0 : i32
    %101 = tpu.memref_slice %arg2[%100, %c0_i32_76] : memref<1000x128xf32, #tpu.memory_space<any>> -> memref<1x128xf32, #tpu.memory_space<any>>
    %c12_i32 = arith.constant 12 : i32
    %c0_i32_77 = arith.constant 0 : i32
    %102 = tpu.memref_slice %arg3[%c12_i32, %c0_i32_77] : memref<16x128xf32, #tpu.memory_space<vmem>> -> memref<1x128xf32, #tpu.memory_space<vmem>>
    %103 = tpu.memref_slice %arg4[%c1_i32_74, %c4_i32_75] : memref<8x8x!tpu.dma_semaphore, #tpu.memory_space<semaphore_mem>> -> memref<1x1x!tpu.dma_semaphore, #tpu.memory_space<semaphore_mem>>
    %104 = tpu.memref_squeeze %103 : memref<1x1x!tpu.dma_semaphore, #tpu.memory_space<semaphore_mem>> -> memref<!tpu.dma_semaphore, #tpu.memory_space<semaphore_mem>>
    tpu.enqueue_dma source(%101 : memref<1x128xf32, #tpu.memory_space<any>>) target(%102 : memref<1x128xf32, #tpu.memory_space<vmem>>) target_semaphore(%104 : memref<!tpu.dma_semaphore, #tpu.memory_space<semaphore_mem>>)
    %c8_i32_78 = arith.constant 8 : i32
    %105 = arith.addi %0, %c8_i32_78 : i32
    %c5_i32_79 = arith.constant 5 : i32
    %106 = arith.addi %105, %c5_i32_79 : i32
    %107 = arith.index_cast %106 : i32 to index
    %108 = memref.load %arg1[%107] : memref<16xi32, #tpu.memory_space<smem>>
    %c1_i32_80 = arith.constant 1 : i32
    %c5_i32_81 = arith.constant 5 : i32
    %c0_i32_82 = arith.constant 0 : i32
    %109 = tpu.memref_slice %arg2[%108, %c0_i32_82] : memref<1000x128xf32, #tpu.memory_space<any>> -> memref<1x128xf32, #tpu.memory_space<any>>
    %c13_i32 = arith.constant 13 : i32
    %c0_i32_83 = arith.constant 0 : i32
    %110 = tpu.memref_slice %arg3[%c13_i32, %c0_i32_83] : memref<16x128xf32, #tpu.memory_space<vmem>> -> memref<1x128xf32, #tpu.memory_space<vmem>>
    %111 = tpu.memref_slice %arg4[%c1_i32_80, %c5_i32_81] : memref<8x8x!tpu.dma_semaphore, #tpu.memory_space<semaphore_mem>> -> memref<1x1x!tpu.dma_semaphore, #tpu.memory_space<semaphore_mem>>
    %112 = tpu.memref_squeeze %111 : memref<1x1x!tpu.dma_semaphore, #tpu.memory_space<semaphore_mem>> -> memref<!tpu.dma_semaphore, #tpu.memory_space<semaphore_mem>>
    tpu.enqueue_dma source(%109 : memref<1x128xf32, #tpu.memory_space<any>>) target(%110 : memref<1x128xf32, #tpu.memory_space<vmem>>) target_semaphore(%112 : memref<!tpu.dma_semaphore, #tpu.memory_space<semaphore_mem>>)
    %c8_i32_84 = arith.constant 8 : i32
    %113 = arith.addi %0, %c8_i32_84 : i32
    %c6_i32_85 = arith.constant 6 : i32
    %114 = arith.addi %113, %c6_i32_85 : i32
    %115 = arith.index_cast %114 : i32 to index
    %116 = memref.load %arg1[%115] : memref<16xi32, #tpu.memory_space<smem>>
    %c1_i32_86 = arith.constant 1 : i32
    %c6_i32_87 = arith.constant 6 : i32
    %c0_i32_88 = arith.constant 0 : i32
    %117 = tpu.memref_slice %arg2[%116, %c0_i32_88] : memref<1000x128xf32, #tpu.memory_space<any>> -> memref<1x128xf32, #tpu.memory_space<any>>
    %c14_i32 = arith.constant 14 : i32
    %c0_i32_89 = arith.constant 0 : i32
    %118 = tpu.memref_slice %arg3[%c14_i32, %c0_i32_89] : memref<16x128xf32, #tpu.memory_space<vmem>> -> memref<1x128xf32, #tpu.memory_space<vmem>>
    %119 = tpu.memref_slice %arg4[%c1_i32_86, %c6_i32_87] : memref<8x8x!tpu.dma_semaphore, #tpu.memory_space<semaphore_mem>> -> memref<1x1x!tpu.dma_semaphore, #tpu.memory_space<semaphore_mem>>
    %120 = tpu.memref_squeeze %119 : memref<1x1x!tpu.dma_semaphore, #tpu.memory_space<semaphore_mem>> -> memref<!tpu.dma_semaphore, #tpu.memory_space<semaphore_mem>>
    tpu.enqueue_dma source(%117 : memref<1x128xf32, #tpu.memory_space<any>>) target(%118 : memref<1x128xf32, #tpu.memory_space<vmem>>) target_semaphore(%120 : memref<!tpu.dma_semaphore, #tpu.memory_space<semaphore_mem>>)
    %c8_i32_90 = arith.constant 8 : i32
    %121 = arith.addi %0, %c8_i32_90 : i32
    %c7_i32_91 = arith.constant 7 : i32
    %122 = arith.addi %121, %c7_i32_91 : i32
    %123 = arith.index_cast %122 : i32 to index
    %124 = memref.load %arg1[%123] : memref<16xi32, #tpu.memory_space<smem>>
    %c1_i32_92 = arith.constant 1 : i32
    %c7_i32_93 = arith.constant 7 : i32
    %c0_i32_94 = arith.constant 0 : i32
    %125 = tpu.memref_slice %arg2[%124, %c0_i32_94] : memref<1000x128xf32, #tpu.memory_space<any>> -> memref<1x128xf32, #tpu.memory_space<any>>
    %c15_i32 = arith.constant 15 : i32
    %c0_i32_95 = arith.constant 0 : i32
    %126 = tpu.memref_slice %arg3[%c15_i32, %c0_i32_95] : memref<16x128xf32, #tpu.memory_space<vmem>> -> memref<1x128xf32, #tpu.memory_space<vmem>>
    %127 = tpu.memref_slice %arg4[%c1_i32_92, %c7_i32_93] : memref<8x8x!tpu.dma_semaphore, #tpu.memory_space<semaphore_mem>> -> memref<1x1x!tpu.dma_semaphore, #tpu.memory_space<semaphore_mem>>
    %128 = tpu.memref_squeeze %127 : memref<1x1x!tpu.dma_semaphore, #tpu.memory_space<semaphore_mem>> -> memref<!tpu.dma_semaphore, #tpu.memory_space<semaphore_mem>>
    tpu.enqueue_dma source(%125 : memref<1x128xf32, #tpu.memory_space<any>>) target(%126 : memref<1x128xf32, #tpu.memory_space<vmem>>) target_semaphore(%128 : memref<!tpu.dma_semaphore, #tpu.memory_space<semaphore_mem>>)
    %c0_i32_96 = arith.constant 0 : i32
    %c8_i32_97 = arith.constant 8 : i32
    %c0_i32_98 = arith.constant 0 : i32
    %129 = arith.cmpi eq, %c8_i32_97, %c0_i32_98 : i32
    %c1_i32_99 = arith.constant 1 : i32
    %130 = arith.select %129, %c1_i32_99, %c8_i32_97 : i32
    %131 = arith.remsi %c0_i32_96, %130 : i32
    %c0_i32_100 = arith.constant 0 : i32
    %132 = arith.cmpi ne, %131, %c0_i32_100 : i32
    %c0_i32_101 = arith.constant 0 : i32
    %133 = arith.cmpi slt, %131, %c0_i32_101 : i32
    %c0_i32_102 = arith.constant 0 : i32
    %134 = arith.cmpi slt, %130, %c0_i32_102 : i32
    %135 = arith.xori %133, %134 : i1
    %136 = arith.andi %135, %132 : i1
    %137 = arith.addi %131, %130 : i32
    %138 = arith.select %136, %137, %131 : i32
    %c8_i32_103 = arith.constant 8 : i32
    %139 = arith.muli %c0_i32_96, %c8_i32_103 : i32
    %c0_i32_104 = arith.constant 0 : i32
    %140 = arith.addi %139, %c0_i32_104 : i32
    %c0_i32_105 = arith.constant 0 : i32
    %c0_i32_106 = arith.constant 0 : i32
    %c0_i32_107 = arith.constant 0 : i32
    %141 = tpu.memref_slice %arg2[%c0_i32_106, %c0_i32_107] : memref<1000x128xf32, #tpu.memory_space<any>> -> memref<1x128xf32, #tpu.memory_space<any>>
    %c0_i32_108 = arith.constant 0 : i32
    %142 = tpu.memref_slice %arg3[%140, %c0_i32_108] : memref<16x128xf32, #tpu.memory_space<vmem>> -> memref<1x128xf32, #tpu.memory_space<vmem>>
    %143 = tpu.memref_slice %arg4[%138, %c0_i32_105] : memref<8x8x!tpu.dma_semaphore, #tpu.memory_space<semaphore_mem>> -> memref<1x1x!tpu.dma_semaphore, #tpu.memory_space<semaphore_mem>>
    %144 = tpu.memref_squeeze %143 : memref<1x1x!tpu.dma_semaphore, #tpu.memory_space<semaphore_mem>> -> memref<!tpu.dma_semaphore, #tpu.memory_space<semaphore_mem>>
    tpu.wait_dma2 semaphore(%144 : memref<!tpu.dma_semaphore, #tpu.memory_space<semaphore_mem>>) src(%141 : memref<1x128xf32, #tpu.memory_space<any>>) dst(%142 : memref<1x128xf32, #tpu.memory_space<vmem>>)
    %c1_i32_109 = arith.constant 1 : i32
    %145 = arith.addi %139, %c1_i32_109 : i32
    %c1_i32_110 = arith.constant 1 : i32
    %c0_i32_111 = arith.constant 0 : i32
    %c0_i32_112 = arith.constant 0 : i32
    %146 = tpu.memref_slice %arg2[%c0_i32_111, %c0_i32_112] : memref<1000x128xf32, #tpu.memory_space<any>> -> memref<1x128xf32, #tpu.memory_space<any>>
    %c0_i32_113 = arith.constant 0 : i32
    %147 = tpu.memref_slice %arg3[%145, %c0_i32_113] : memref<16x128xf32, #tpu.memory_space<vmem>> -> memref<1x128xf32, #tpu.memory_space<vmem>>
    %148 = tpu.memref_slice %arg4[%138, %c1_i32_110] : memref<8x8x!tpu.dma_semaphore, #tpu.memory_space<semaphore_mem>> -> memref<1x1x!tpu.dma_semaphore, #tpu.memory_space<semaphore_mem>>
    %149 = tpu.memref_squeeze %148 : memref<1x1x!tpu.dma_semaphore, #tpu.memory_space<semaphore_mem>> -> memref<!tpu.dma_semaphore, #tpu.memory_space<semaphore_mem>>
    tpu.wait_dma2 semaphore(%149 : memref<!tpu.dma_semaphore, #tpu.memory_space<semaphore_mem>>) src(%146 : memref<1x128xf32, #tpu.memory_space<any>>) dst(%147 : memref<1x128xf32, #tpu.memory_space<vmem>>)
    %c2_i32_114 = arith.constant 2 : i32
    %150 = arith.addi %139, %c2_i32_114 : i32
    %c2_i32_115 = arith.constant 2 : i32
    %c0_i32_116 = arith.constant 0 : i32
    %c0_i32_117 = arith.constant 0 : i32
    %151 = tpu.memref_slice %arg2[%c0_i32_116, %c0_i32_117] : memref<1000x128xf32, #tpu.memory_space<any>> -> memref<1x128xf32, #tpu.memory_space<any>>
    %c0_i32_118 = arith.constant 0 : i32
    %152 = tpu.memref_slice %arg3[%150, %c0_i32_118] : memref<16x128xf32, #tpu.memory_space<vmem>> -> memref<1x128xf32, #tpu.memory_space<vmem>>
    %153 = tpu.memref_slice %arg4[%138, %c2_i32_115] : memref<8x8x!tpu.dma_semaphore, #tpu.memory_space<semaphore_mem>> -> memref<1x1x!tpu.dma_semaphore, #tpu.memory_space<semaphore_mem>>
    %154 = tpu.memref_squeeze %153 : memref<1x1x!tpu.dma_semaphore, #tpu.memory_space<semaphore_mem>> -> memref<!tpu.dma_semaphore, #tpu.memory_space<semaphore_mem>>
    tpu.wait_dma2 semaphore(%154 : memref<!tpu.dma_semaphore, #tpu.memory_space<semaphore_mem>>) src(%151 : memref<1x128xf32, #tpu.memory_space<any>>) dst(%152 : memref<1x128xf32, #tpu.memory_space<vmem>>)
    %c3_i32_119 = arith.constant 3 : i32
    %155 = arith.addi %139, %c3_i32_119 : i32
    %c3_i32_120 = arith.constant 3 : i32
    %c0_i32_121 = arith.constant 0 : i32
    %c0_i32_122 = arith.constant 0 : i32
    %156 = tpu.memref_slice %arg2[%c0_i32_121, %c0_i32_122] : memref<1000x128xf32, #tpu.memory_space<any>> -> memref<1x128xf32, #tpu.memory_space<any>>
    %c0_i32_123 = arith.constant 0 : i32
    %157 = tpu.memref_slice %arg3[%155, %c0_i32_123] : memref<16x128xf32, #tpu.memory_space<vmem>> -> memref<1x128xf32, #tpu.memory_space<vmem>>
    %158 = tpu.memref_slice %arg4[%138, %c3_i32_120] : memref<8x8x!tpu.dma_semaphore, #tpu.memory_space<semaphore_mem>> -> memref<1x1x!tpu.dma_semaphore, #tpu.memory_space<semaphore_mem>>
    %159 = tpu.memref_squeeze %158 : memref<1x1x!tpu.dma_semaphore, #tpu.memory_space<semaphore_mem>> -> memref<!tpu.dma_semaphore, #tpu.memory_space<semaphore_mem>>
    tpu.wait_dma2 semaphore(%159 : memref<!tpu.dma_semaphore, #tpu.memory_space<semaphore_mem>>) src(%156 : memref<1x128xf32, #tpu.memory_space<any>>) dst(%157 : memref<1x128xf32, #tpu.memory_space<vmem>>)
    %c4_i32_124 = arith.constant 4 : i32
    %160 = arith.addi %139, %c4_i32_124 : i32
    %c4_i32_125 = arith.constant 4 : i32
    %c0_i32_126 = arith.constant 0 : i32
    %c0_i32_127 = arith.constant 0 : i32
    %161 = tpu.memref_slice %arg2[%c0_i32_126, %c0_i32_127] : memref<1000x128xf32, #tpu.memory_space<any>> -> memref<1x128xf32, #tpu.memory_space<any>>
    %c0_i32_128 = arith.constant 0 : i32
    %162 = tpu.memref_slice %arg3[%160, %c0_i32_128] : memref<16x128xf32, #tpu.memory_space<vmem>> -> memref<1x128xf32, #tpu.memory_space<vmem>>
    %163 = tpu.memref_slice %arg4[%138, %c4_i32_125] : memref<8x8x!tpu.dma_semaphore, #tpu.memory_space<semaphore_mem>> -> memref<1x1x!tpu.dma_semaphore, #tpu.memory_space<semaphore_mem>>
    %164 = tpu.memref_squeeze %163 : memref<1x1x!tpu.dma_semaphore, #tpu.memory_space<semaphore_mem>> -> memref<!tpu.dma_semaphore, #tpu.memory_space<semaphore_mem>>
    tpu.wait_dma2 semaphore(%164 : memref<!tpu.dma_semaphore, #tpu.memory_space<semaphore_mem>>) src(%161 : memref<1x128xf32, #tpu.memory_space<any>>) dst(%162 : memref<1x128xf32, #tpu.memory_space<vmem>>)
    %c5_i32_129 = arith.constant 5 : i32
    %165 = arith.addi %139, %c5_i32_129 : i32
    %c5_i32_130 = arith.constant 5 : i32
    %c0_i32_131 = arith.constant 0 : i32
    %c0_i32_132 = arith.constant 0 : i32
    %166 = tpu.memref_slice %arg2[%c0_i32_131, %c0_i32_132] : memref<1000x128xf32, #tpu.memory_space<any>> -> memref<1x128xf32, #tpu.memory_space<any>>
    %c0_i32_133 = arith.constant 0 : i32
    %167 = tpu.memref_slice %arg3[%165, %c0_i32_133] : memref<16x128xf32, #tpu.memory_space<vmem>> -> memref<1x128xf32, #tpu.memory_space<vmem>>
    %168 = tpu.memref_slice %arg4[%138, %c5_i32_130] : memref<8x8x!tpu.dma_semaphore, #tpu.memory_space<semaphore_mem>> -> memref<1x1x!tpu.dma_semaphore, #tpu.memory_space<semaphore_mem>>
    %169 = tpu.memref_squeeze %168 : memref<1x1x!tpu.dma_semaphore, #tpu.memory_space<semaphore_mem>> -> memref<!tpu.dma_semaphore, #tpu.memory_space<semaphore_mem>>
    tpu.wait_dma2 semaphore(%169 : memref<!tpu.dma_semaphore, #tpu.memory_space<semaphore_mem>>) src(%166 : memref<1x128xf32, #tpu.memory_space<any>>) dst(%167 : memref<1x128xf32, #tpu.memory_space<vmem>>)
    %c6_i32_134 = arith.constant 6 : i32
    %170 = arith.addi %139, %c6_i32_134 : i32
    %c6_i32_135 = arith.constant 6 : i32
    %c0_i32_136 = arith.constant 0 : i32
    %c0_i32_137 = arith.constant 0 : i32
    %171 = tpu.memref_slice %arg2[%c0_i32_136, %c0_i32_137] : memref<1000x128xf32, #tpu.memory_space<any>> -> memref<1x128xf32, #tpu.memory_space<any>>
    %c0_i32_138 = arith.constant 0 : i32
    %172 = tpu.memref_slice %arg3[%170, %c0_i32_138] : memref<16x128xf32, #tpu.memory_space<vmem>> -> memref<1x128xf32, #tpu.memory_space<vmem>>
    %173 = tpu.memref_slice %arg4[%138, %c6_i32_135] : memref<8x8x!tpu.dma_semaphore, #tpu.memory_space<semaphore_mem>> -> memref<1x1x!tpu.dma_semaphore, #tpu.memory_space<semaphore_mem>>
    %174 = tpu.memref_squeeze %173 : memref<1x1x!tpu.dma_semaphore, #tpu.memory_space<semaphore_mem>> -> memref<!tpu.dma_semaphore, #tpu.memory_space<semaphore_mem>>
    tpu.wait_dma2 semaphore(%174 : memref<!tpu.dma_semaphore, #tpu.memory_space<semaphore_mem>>) src(%171 : memref<1x128xf32, #tpu.memory_space<any>>) dst(%172 : memref<1x128xf32, #tpu.memory_space<vmem>>)
    %c7_i32_139 = arith.constant 7 : i32
    %175 = arith.addi %139, %c7_i32_139 : i32
    %c7_i32_140 = arith.constant 7 : i32
    %c0_i32_141 = arith.constant 0 : i32
    %c0_i32_142 = arith.constant 0 : i32
    %176 = tpu.memref_slice %arg2[%c0_i32_141, %c0_i32_142] : memref<1000x128xf32, #tpu.memory_space<any>> -> memref<1x128xf32, #tpu.memory_space<any>>
    %c0_i32_143 = arith.constant 0 : i32
    %177 = tpu.memref_slice %arg3[%175, %c0_i32_143] : memref<16x128xf32, #tpu.memory_space<vmem>> -> memref<1x128xf32, #tpu.memory_space<vmem>>
    %178 = tpu.memref_slice %arg4[%138, %c7_i32_140] : memref<8x8x!tpu.dma_semaphore, #tpu.memory_space<semaphore_mem>> -> memref<1x1x!tpu.dma_semaphore, #tpu.memory_space<semaphore_mem>>
    %179 = tpu.memref_squeeze %178 : memref<1x1x!tpu.dma_semaphore, #tpu.memory_space<semaphore_mem>> -> memref<!tpu.dma_semaphore, #tpu.memory_space<semaphore_mem>>
    tpu.wait_dma2 semaphore(%179 : memref<!tpu.dma_semaphore, #tpu.memory_space<semaphore_mem>>) src(%176 : memref<1x128xf32, #tpu.memory_space<any>>) dst(%177 : memref<1x128xf32, #tpu.memory_space<vmem>>)
    %c8_i32_144 = arith.constant 8 : i32
    %180 = arith.addi %c0_i32_96, %c8_i32_144 : i32
    %c2_i32_145 = arith.constant 2 : i32
    %181 = arith.cmpi slt, %180, %c2_i32_145 : i32
    %182 = arith.extui %181 : i1 to i32
    %c0_i32_146 = arith.constant 0 : i32
    %183 = arith.cmpi ne, %182, %c0_i32_146 : i32
    scf.if %183 {
      %c8_i32_205 = arith.constant 8 : i32
      %255 = arith.addi %c0_i32_96, %c8_i32_205 : i32
      %c8_i32_206 = arith.constant 8 : i32
      %c0_i32_207 = arith.constant 0 : i32
      %256 = arith.cmpi eq, %c8_i32_206, %c0_i32_207 : i32
      %c1_i32_208 = arith.constant 1 : i32
      %257 = arith.select %256, %c1_i32_208, %c8_i32_206 : i32
      %258 = arith.remsi %255, %257 : i32
      %c0_i32_209 = arith.constant 0 : i32
      %259 = arith.cmpi ne, %258, %c0_i32_209 : i32
      %c0_i32_210 = arith.constant 0 : i32
      %260 = arith.cmpi slt, %258, %c0_i32_210 : i32
      %c0_i32_211 = arith.constant 0 : i32
      %261 = arith.cmpi slt, %257, %c0_i32_211 : i32
      %262 = arith.xori %260, %261 : i1
      %263 = arith.andi %262, %259 : i1
      %264 = arith.addi %258, %257 : i32
      %265 = arith.select %263, %264, %258 : i32
      %c8_i32_212 = arith.constant 8 : i32
      %266 = arith.muli %255, %c8_i32_212 : i32
      %267 = arith.addi %0, %266 : i32
      %c0_i32_213 = arith.constant 0 : i32
      %268 = arith.addi %267, %c0_i32_213 : i32
      %269 = arith.index_cast %268 : i32 to index
      %270 = memref.load %arg1[%269] : memref<16xi32, #tpu.memory_space<smem>>
      %c0_i32_214 = arith.constant 0 : i32
      %271 = arith.addi %266, %c0_i32_214 : i32
      %c0_i32_215 = arith.constant 0 : i32
      %c0_i32_216 = arith.constant 0 : i32
      %272 = tpu.memref_slice %arg2[%270, %c0_i32_216] : memref<1000x128xf32, #tpu.memory_space<any>> -> memref<1x128xf32, #tpu.memory_space<any>>
      %c0_i32_217 = arith.constant 0 : i32
      %273 = tpu.memref_slice %arg3[%271, %c0_i32_217] : memref<16x128xf32, #tpu.memory_space<vmem>> -> memref<1x128xf32, #tpu.memory_space<vmem>>
      %274 = tpu.memref_slice %arg4[%265, %c0_i32_215] : memref<8x8x!tpu.dma_semaphore, #tpu.memory_space<semaphore_mem>> -> memref<1x1x!tpu.dma_semaphore, #tpu.memory_space<semaphore_mem>>
      %275 = tpu.memref_squeeze %274 : memref<1x1x!tpu.dma_semaphore, #tpu.memory_space<semaphore_mem>> -> memref<!tpu.dma_semaphore, #tpu.memory_space<semaphore_mem>>
      tpu.enqueue_dma source(%272 : memref<1x128xf32, #tpu.memory_space<any>>) target(%273 : memref<1x128xf32, #tpu.memory_space<vmem>>) target_semaphore(%275 : memref<!tpu.dma_semaphore, #tpu.memory_space<semaphore_mem>>)
      %276 = arith.addi %0, %266 : i32
      %c1_i32_218 = arith.constant 1 : i32
      %277 = arith.addi %276, %c1_i32_218 : i32
      %278 = arith.index_cast %277 : i32 to index
      %279 = memref.load %arg1[%278] : memref<16xi32, #tpu.memory_space<smem>>
      %c1_i32_219 = arith.constant 1 : i32
      %280 = arith.addi %266, %c1_i32_219 : i32
      %c1_i32_220 = arith.constant 1 : i32
      %c0_i32_221 = arith.constant 0 : i32
      %281 = tpu.memref_slice %arg2[%279, %c0_i32_221] : memref<1000x128xf32, #tpu.memory_space<any>> -> memref<1x128xf32, #tpu.memory_space<any>>
      %c0_i32_222 = arith.constant 0 : i32
      %282 = tpu.memref_slice %arg3[%280, %c0_i32_222] : memref<16x128xf32, #tpu.memory_space<vmem>> -> memref<1x128xf32, #tpu.memory_space<vmem>>
      %283 = tpu.memref_slice %arg4[%265, %c1_i32_220] : memref<8x8x!tpu.dma_semaphore, #tpu.memory_space<semaphore_mem>> -> memref<1x1x!tpu.dma_semaphore, #tpu.memory_space<semaphore_mem>>
      %284 = tpu.memref_squeeze %283 : memref<1x1x!tpu.dma_semaphore, #tpu.memory_space<semaphore_mem>> -> memref<!tpu.dma_semaphore, #tpu.memory_space<semaphore_mem>>
      tpu.enqueue_dma source(%281 : memref<1x128xf32, #tpu.memory_space<any>>) target(%282 : memref<1x128xf32, #tpu.memory_space<vmem>>) target_semaphore(%284 : memref<!tpu.dma_semaphore, #tpu.memory_space<semaphore_mem>>)
      %285 = arith.addi %0, %266 : i32
      %c2_i32_223 = arith.constant 2 : i32
      %286 = arith.addi %285, %c2_i32_223 : i32
      %287 = arith.index_cast %286 : i32 to index
      %288 = memref.load %arg1[%287] : memref<16xi32, #tpu.memory_space<smem>>
      %c2_i32_224 = arith.constant 2 : i32
      %289 = arith.addi %266, %c2_i32_224 : i32
      %c2_i32_225 = arith.constant 2 : i32
      %c0_i32_226 = arith.constant 0 : i32
      %290 = tpu.memref_slice %arg2[%288, %c0_i32_226] : memref<1000x128xf32, #tpu.memory_space<any>> -> memref<1x128xf32, #tpu.memory_space<any>>
      %c0_i32_227 = arith.constant 0 : i32
      %291 = tpu.memref_slice %arg3[%289, %c0_i32_227] : memref<16x128xf32, #tpu.memory_space<vmem>> -> memref<1x128xf32, #tpu.memory_space<vmem>>
      %292 = tpu.memref_slice %arg4[%265, %c2_i32_225] : memref<8x8x!tpu.dma_semaphore, #tpu.memory_space<semaphore_mem>> -> memref<1x1x!tpu.dma_semaphore, #tpu.memory_space<semaphore_mem>>
      %293 = tpu.memref_squeeze %292 : memref<1x1x!tpu.dma_semaphore, #tpu.memory_space<semaphore_mem>> -> memref<!tpu.dma_semaphore, #tpu.memory_space<semaphore_mem>>
      tpu.enqueue_dma source(%290 : memref<1x128xf32, #tpu.memory_space<any>>) target(%291 : memref<1x128xf32, #tpu.memory_space<vmem>>) target_semaphore(%293 : memref<!tpu.dma_semaphore, #tpu.memory_space<semaphore_mem>>)
      %294 = arith.addi %0, %266 : i32
      %c3_i32_228 = arith.constant 3 : i32
      %295 = arith.addi %294, %c3_i32_228 : i32
      %296 = arith.index_cast %295 : i32 to index
      %297 = memref.load %arg1[%296] : memref<16xi32, #tpu.memory_space<smem>>
      %c3_i32_229 = arith.constant 3 : i32
      %298 = arith.addi %266, %c3_i32_229 : i32
      %c3_i32_230 = arith.constant 3 : i32
      %c0_i32_231 = arith.constant 0 : i32
      %299 = tpu.memref_slice %arg2[%297, %c0_i32_231] : memref<1000x128xf32, #tpu.memory_space<any>> -> memref<1x128xf32, #tpu.memory_space<any>>
      %c0_i32_232 = arith.constant 0 : i32
      %300 = tpu.memref_slice %arg3[%298, %c0_i32_232] : memref<16x128xf32, #tpu.memory_space<vmem>> -> memref<1x128xf32, #tpu.memory_space<vmem>>
      %301 = tpu.memref_slice %arg4[%265, %c3_i32_230] : memref<8x8x!tpu.dma_semaphore, #tpu.memory_space<semaphore_mem>> -> memref<1x1x!tpu.dma_semaphore, #tpu.memory_space<semaphore_mem>>
      %302 = tpu.memref_squeeze %301 : memref<1x1x!tpu.dma_semaphore, #tpu.memory_space<semaphore_mem>> -> memref<!tpu.dma_semaphore, #tpu.memory_space<semaphore_mem>>
      tpu.enqueue_dma source(%299 : memref<1x128xf32, #tpu.memory_space<any>>) target(%300 : memref<1x128xf32, #tpu.memory_space<vmem>>) target_semaphore(%302 : memref<!tpu.dma_semaphore, #tpu.memory_space<semaphore_mem>>)
      %303 = arith.addi %0, %266 : i32
      %c4_i32_233 = arith.constant 4 : i32
      %304 = arith.addi %303, %c4_i32_233 : i32
      %305 = arith.index_cast %304 : i32 to index
      %306 = memref.load %arg1[%305] : memref<16xi32, #tpu.memory_space<smem>>
      %c4_i32_234 = arith.constant 4 : i32
      %307 = arith.addi %266, %c4_i32_234 : i32
      %c4_i32_235 = arith.constant 4 : i32
      %c0_i32_236 = arith.constant 0 : i32
      %308 = tpu.memref_slice %arg2[%306, %c0_i32_236] : memref<1000x128xf32, #tpu.memory_space<any>> -> memref<1x128xf32, #tpu.memory_space<any>>
      %c0_i32_237 = arith.constant 0 : i32
      %309 = tpu.memref_slice %arg3[%307, %c0_i32_237] : memref<16x128xf32, #tpu.memory_space<vmem>> -> memref<1x128xf32, #tpu.memory_space<vmem>>
      %310 = tpu.memref_slice %arg4[%265, %c4_i32_235] : memref<8x8x!tpu.dma_semaphore, #tpu.memory_space<semaphore_mem>> -> memref<1x1x!tpu.dma_semaphore, #tpu.memory_space<semaphore_mem>>
      %311 = tpu.memref_squeeze %310 : memref<1x1x!tpu.dma_semaphore, #tpu.memory_space<semaphore_mem>> -> memref<!tpu.dma_semaphore, #tpu.memory_space<semaphore_mem>>
      tpu.enqueue_dma source(%308 : memref<1x128xf32, #tpu.memory_space<any>>) target(%309 : memref<1x128xf32, #tpu.memory_space<vmem>>) target_semaphore(%311 : memref<!tpu.dma_semaphore, #tpu.memory_space<semaphore_mem>>)
      %312 = arith.addi %0, %266 : i32
      %c5_i32_238 = arith.constant 5 : i32
      %313 = arith.addi %312, %c5_i32_238 : i32
      %314 = arith.index_cast %313 : i32 to index
      %315 = memref.load %arg1[%314] : memref<16xi32, #tpu.memory_space<smem>>
      %c5_i32_239 = arith.constant 5 : i32
      %316 = arith.addi %266, %c5_i32_239 : i32
      %c5_i32_240 = arith.constant 5 : i32
      %c0_i32_241 = arith.constant 0 : i32
      %317 = tpu.memref_slice %arg2[%315, %c0_i32_241] : memref<1000x128xf32, #tpu.memory_space<any>> -> memref<1x128xf32, #tpu.memory_space<any>>
      %c0_i32_242 = arith.constant 0 : i32
      %318 = tpu.memref_slice %arg3[%316, %c0_i32_242] : memref<16x128xf32, #tpu.memory_space<vmem>> -> memref<1x128xf32, #tpu.memory_space<vmem>>
      %319 = tpu.memref_slice %arg4[%265, %c5_i32_240] : memref<8x8x!tpu.dma_semaphore, #tpu.memory_space<semaphore_mem>> -> memref<1x1x!tpu.dma_semaphore, #tpu.memory_space<semaphore_mem>>
      %320 = tpu.memref_squeeze %319 : memref<1x1x!tpu.dma_semaphore, #tpu.memory_space<semaphore_mem>> -> memref<!tpu.dma_semaphore, #tpu.memory_space<semaphore_mem>>
      tpu.enqueue_dma source(%317 : memref<1x128xf32, #tpu.memory_space<any>>) target(%318 : memref<1x128xf32, #tpu.memory_space<vmem>>) target_semaphore(%320 : memref<!tpu.dma_semaphore, #tpu.memory_space<semaphore_mem>>)
      %321 = arith.addi %0, %266 : i32
      %c6_i32_243 = arith.constant 6 : i32
      %322 = arith.addi %321, %c6_i32_243 : i32
      %323 = arith.index_cast %322 : i32 to index
      %324 = memref.load %arg1[%323] : memref<16xi32, #tpu.memory_space<smem>>
      %c6_i32_244 = arith.constant 6 : i32
      %325 = arith.addi %266, %c6_i32_244 : i32
      %c6_i32_245 = arith.constant 6 : i32
      %c0_i32_246 = arith.constant 0 : i32
      %326 = tpu.memref_slice %arg2[%324, %c0_i32_246] : memref<1000x128xf32, #tpu.memory_space<any>> -> memref<1x128xf32, #tpu.memory_space<any>>
      %c0_i32_247 = arith.constant 0 : i32
      %327 = tpu.memref_slice %arg3[%325, %c0_i32_247] : memref<16x128xf32, #tpu.memory_space<vmem>> -> memref<1x128xf32, #tpu.memory_space<vmem>>
      %328 = tpu.memref_slice %arg4[%265, %c6_i32_245] : memref<8x8x!tpu.dma_semaphore, #tpu.memory_space<semaphore_mem>> -> memref<1x1x!tpu.dma_semaphore, #tpu.memory_space<semaphore_mem>>
      %329 = tpu.memref_squeeze %328 : memref<1x1x!tpu.dma_semaphore, #tpu.memory_space<semaphore_mem>> -> memref<!tpu.dma_semaphore, #tpu.memory_space<semaphore_mem>>
      tpu.enqueue_dma source(%326 : memref<1x128xf32, #tpu.memory_space<any>>) target(%327 : memref<1x128xf32, #tpu.memory_space<vmem>>) target_semaphore(%329 : memref<!tpu.dma_semaphore, #tpu.memory_space<semaphore_mem>>)
      %330 = arith.addi %0, %266 : i32
      %c7_i32_248 = arith.constant 7 : i32
      %331 = arith.addi %330, %c7_i32_248 : i32
      %332 = arith.index_cast %331 : i32 to index
      %333 = memref.load %arg1[%332] : memref<16xi32, #tpu.memory_space<smem>>
      %c7_i32_249 = arith.constant 7 : i32
      %334 = arith.addi %266, %c7_i32_249 : i32
      %c7_i32_250 = arith.constant 7 : i32
      %c0_i32_251 = arith.constant 0 : i32
      %335 = tpu.memref_slice %arg2[%333, %c0_i32_251] : memref<1000x128xf32, #tpu.memory_space<any>> -> memref<1x128xf32, #tpu.memory_space<any>>
      %c0_i32_252 = arith.constant 0 : i32
      %336 = tpu.memref_slice %arg3[%334, %c0_i32_252] : memref<16x128xf32, #tpu.memory_space<vmem>> -> memref<1x128xf32, #tpu.memory_space<vmem>>
      %337 = tpu.memref_slice %arg4[%265, %c7_i32_250] : memref<8x8x!tpu.dma_semaphore, #tpu.memory_space<semaphore_mem>> -> memref<1x1x!tpu.dma_semaphore, #tpu.memory_space<semaphore_mem>>
      %338 = tpu.memref_squeeze %337 : memref<1x1x!tpu.dma_semaphore, #tpu.memory_space<semaphore_mem>> -> memref<!tpu.dma_semaphore, #tpu.memory_space<semaphore_mem>>
      tpu.enqueue_dma source(%335 : memref<1x128xf32, #tpu.memory_space<any>>) target(%336 : memref<1x128xf32, #tpu.memory_space<vmem>>) target_semaphore(%338 : memref<!tpu.dma_semaphore, #tpu.memory_space<semaphore_mem>>)
    } else {
    }
    %c8_i32_147 = arith.constant 8 : i32
    %184 = arith.muli %c0_i32_96, %c8_i32_147 : i32
    %185 = tpu.assume_multiple %184, 8 : i32
    %186 = arith.index_cast %185 : i32 to index
    %c0 = arith.constant 0 : index
    %187 = vector.load %arg3[%186, %c0] : memref<16x128xf32, #tpu.memory_space<vmem>>, vector<8x128xf32>
    %cst = arith.constant 11.3137083 : f32
    %188 = vector.broadcast %cst : f32 to vector<8x128xf32>
    %189 = arith.mulf %187, %188 : vector<8x128xf32>
    %190 = arith.index_cast %185 : i32 to index
    %c0_148 = arith.constant 0 : index
    %191 = vector.load %arg3[%190, %c0_148] : memref<16x128xf32, #tpu.memory_space<vmem>>, vector<8x128xf32>
    tpu.vector_store %arg3[%190, %c0_148], %189 {strides = array<i32>} : memref<16x128xf32, #tpu.memory_space<vmem>>, vector<8x128xf32>,
    %c1_i32_149 = arith.constant 1 : i32
    %c8_i32_150 = arith.constant 8 : i32
    %c0_i32_151 = arith.constant 0 : i32
    %192 = arith.cmpi eq, %c8_i32_150, %c0_i32_151 : i32
    %c1_i32_152 = arith.constant 1 : i32
    %193 = arith.select %192, %c1_i32_152, %c8_i32_150 : i32
    %194 = arith.remsi %c1_i32_149, %193 : i32
    %c0_i32_153 = arith.constant 0 : i32
    %195 = arith.cmpi ne, %194, %c0_i32_153 : i32
    %c0_i32_154 = arith.constant 0 : i32
    %196 = arith.cmpi slt, %194, %c0_i32_154 : i32
    %c0_i32_155 = arith.constant 0 : i32
    %197 = arith.cmpi slt, %193, %c0_i32_155 : i32
    %198 = arith.xori %196, %197 : i1
    %199 = arith.andi %198, %195 : i1
    %200 = arith.addi %194, %193 : i32
    %201 = arith.select %199, %200, %194 : i32
    %c8_i32_156 = arith.constant 8 : i32
    %202 = arith.muli %c1_i32_149, %c8_i32_156 : i32
    %c0_i32_157 = arith.constant 0 : i32
    %203 = arith.addi %202, %c0_i32_157 : i32
    %c0_i32_158 = arith.constant 0 : i32
    %c0_i32_159 = arith.constant 0 : i32
    %c0_i32_160 = arith.constant 0 : i32
    %204 = tpu.memref_slice %arg2[%c0_i32_159, %c0_i32_160] : memref<1000x128xf32, #tpu.memory_space<any>> -> memref<1x128xf32, #tpu.memory_space<any>>
    %c0_i32_161 = arith.constant 0 : i32
    %205 = tpu.memref_slice %arg3[%203, %c0_i32_161] : memref<16x128xf32, #tpu.memory_space<vmem>> -> memref<1x128xf32, #tpu.memory_space<vmem>>
    %206 = tpu.memref_slice %arg4[%201, %c0_i32_158] : memref<8x8x!tpu.dma_semaphore, #tpu.memory_space<semaphore_mem>> -> memref<1x1x!tpu.dma_semaphore, #tpu.memory_space<semaphore_mem>>
    %207 = tpu.memref_squeeze %206 : memref<1x1x!tpu.dma_semaphore, #tpu.memory_space<semaphore_mem>> -> memref<!tpu.dma_semaphore, #tpu.memory_space<semaphore_mem>>
    tpu.wait_dma2 semaphore(%207 : memref<!tpu.dma_semaphore, #tpu.memory_space<semaphore_mem>>) src(%204 : memref<1x128xf32, #tpu.memory_space<any>>) dst(%205 : memref<1x128xf32, #tpu.memory_space<vmem>>)
    %c1_i32_162 = arith.constant 1 : i32
    %208 = arith.addi %202, %c1_i32_162 : i32
    %c1_i32_163 = arith.constant 1 : i32
    %c0_i32_164 = arith.constant 0 : i32
    %c0_i32_165 = arith.constant 0 : i32
    %209 = tpu.memref_slice %arg2[%c0_i32_164, %c0_i32_165] : memref<1000x128xf32, #tpu.memory_space<any>> -> memref<1x128xf32, #tpu.memory_space<any>>
    %c0_i32_166 = arith.constant 0 : i32
    %210 = tpu.memref_slice %arg3[%208, %c0_i32_166] : memref<16x128xf32, #tpu.memory_space<vmem>> -> memref<1x128xf32, #tpu.memory_space<vmem>>
    %211 = tpu.memref_slice %arg4[%201, %c1_i32_163] : memref<8x8x!tpu.dma_semaphore, #tpu.memory_space<semaphore_mem>> -> memref<1x1x!tpu.dma_semaphore, #tpu.memory_space<semaphore_mem>>
    %212 = tpu.memref_squeeze %211 : memref<1x1x!tpu.dma_semaphore, #tpu.memory_space<semaphore_mem>> -> memref<!tpu.dma_semaphore, #tpu.memory_space<semaphore_mem>>
    tpu.wait_dma2 semaphore(%212 : memref<!tpu.dma_semaphore, #tpu.memory_space<semaphore_mem>>) src(%209 : memref<1x128xf32, #tpu.memory_space<any>>) dst(%210 : memref<1x128xf32, #tpu.memory_space<vmem>>)
    %c2_i32_167 = arith.constant 2 : i32
    %213 = arith.addi %202, %c2_i32_167 : i32
    %c2_i32_168 = arith.constant 2 : i32
    %c0_i32_169 = arith.constant 0 : i32
    %c0_i32_170 = arith.constant 0 : i32
    %214 = tpu.memref_slice %arg2[%c0_i32_169, %c0_i32_170] : memref<1000x128xf32, #tpu.memory_space<any>> -> memref<1x128xf32, #tpu.memory_space<any>>
    %c0_i32_171 = arith.constant 0 : i32
    %215 = tpu.memref_slice %arg3[%213, %c0_i32_171] : memref<16x128xf32, #tpu.memory_space<vmem>> -> memref<1x128xf32, #tpu.memory_space<vmem>>
    %216 = tpu.memref_slice %arg4[%201, %c2_i32_168] : memref<8x8x!tpu.dma_semaphore, #tpu.memory_space<semaphore_mem>> -> memref<1x1x!tpu.dma_semaphore, #tpu.memory_space<semaphore_mem>>
    %217 = tpu.memref_squeeze %216 : memref<1x1x!tpu.dma_semaphore, #tpu.memory_space<semaphore_mem>> -> memref<!tpu.dma_semaphore, #tpu.memory_space<semaphore_mem>>
    tpu.wait_dma2 semaphore(%217 : memref<!tpu.dma_semaphore, #tpu.memory_space<semaphore_mem>>) src(%214 : memref<1x128xf32, #tpu.memory_space<any>>) dst(%215 : memref<1x128xf32, #tpu.memory_space<vmem>>)
    %c3_i32_172 = arith.constant 3 : i32
    %218 = arith.addi %202, %c3_i32_172 : i32
    %c3_i32_173 = arith.constant 3 : i32
    %c0_i32_174 = arith.constant 0 : i32
    %c0_i32_175 = arith.constant 0 : i32
    %219 = tpu.memref_slice %arg2[%c0_i32_174, %c0_i32_175] : memref<1000x128xf32, #tpu.memory_space<any>> -> memref<1x128xf32, #tpu.memory_space<any>>
    %c0_i32_176 = arith.constant 0 : i32
    %220 = tpu.memref_slice %arg3[%218, %c0_i32_176] : memref<16x128xf32, #tpu.memory_space<vmem>> -> memref<1x128xf32, #tpu.memory_space<vmem>>
    %221 = tpu.memref_slice %arg4[%201, %c3_i32_173] : memref<8x8x!tpu.dma_semaphore, #tpu.memory_space<semaphore_mem>> -> memref<1x1x!tpu.dma_semaphore, #tpu.memory_space<semaphore_mem>>
    %222 = tpu.memref_squeeze %221 : memref<1x1x!tpu.dma_semaphore, #tpu.memory_space<semaphore_mem>> -> memref<!tpu.dma_semaphore, #tpu.memory_space<semaphore_mem>>
    tpu.wait_dma2 semaphore(%222 : memref<!tpu.dma_semaphore, #tpu.memory_space<semaphore_mem>>) src(%219 : memref<1x128xf32, #tpu.memory_space<any>>) dst(%220 : memref<1x128xf32, #tpu.memory_space<vmem>>)
    %c4_i32_177 = arith.constant 4 : i32
    %223 = arith.addi %202, %c4_i32_177 : i32
    %c4_i32_178 = arith.constant 4 : i32
    %c0_i32_179 = arith.constant 0 : i32
    %c0_i32_180 = arith.constant 0 : i32
    %224 = tpu.memref_slice %arg2[%c0_i32_179, %c0_i32_180] : memref<1000x128xf32, #tpu.memory_space<any>> -> memref<1x128xf32, #tpu.memory_space<any>>
    %c0_i32_181 = arith.constant 0 : i32
    %225 = tpu.memref_slice %arg3[%223, %c0_i32_181] : memref<16x128xf32, #tpu.memory_space<vmem>> -> memref<1x128xf32, #tpu.memory_space<vmem>>
    %226 = tpu.memref_slice %arg4[%201, %c4_i32_178] : memref<8x8x!tpu.dma_semaphore, #tpu.memory_space<semaphore_mem>> -> memref<1x1x!tpu.dma_semaphore, #tpu.memory_space<semaphore_mem>>
    %227 = tpu.memref_squeeze %226 : memref<1x1x!tpu.dma_semaphore, #tpu.memory_space<semaphore_mem>> -> memref<!tpu.dma_semaphore, #tpu.memory_space<semaphore_mem>>
    tpu.wait_dma2 semaphore(%227 : memref<!tpu.dma_semaphore, #tpu.memory_space<semaphore_mem>>) src(%224 : memref<1x128xf32, #tpu.memory_space<any>>) dst(%225 : memref<1x128xf32, #tpu.memory_space<vmem>>)
    %c5_i32_182 = arith.constant 5 : i32
    %228 = arith.addi %202, %c5_i32_182 : i32
    %c5_i32_183 = arith.constant 5 : i32
    %c0_i32_184 = arith.constant 0 : i32
    %c0_i32_185 = arith.constant 0 : i32
    %229 = tpu.memref_slice %arg2[%c0_i32_184, %c0_i32_185] : memref<1000x128xf32, #tpu.memory_space<any>> -> memref<1x128xf32, #tpu.memory_space<any>>
    %c0_i32_186 = arith.constant 0 : i32
    %230 = tpu.memref_slice %arg3[%228, %c0_i32_186] : memref<16x128xf32, #tpu.memory_space<vmem>> -> memref<1x128xf32, #tpu.memory_space<vmem>>
    %231 = tpu.memref_slice %arg4[%201, %c5_i32_183] : memref<8x8x!tpu.dma_semaphore, #tpu.memory_space<semaphore_mem>> -> memref<1x1x!tpu.dma_semaphore, #tpu.memory_space<semaphore_mem>>
    %232 = tpu.memref_squeeze %231 : memref<1x1x!tpu.dma_semaphore, #tpu.memory_space<semaphore_mem>> -> memref<!tpu.dma_semaphore, #tpu.memory_space<semaphore_mem>>
    tpu.wait_dma2 semaphore(%232 : memref<!tpu.dma_semaphore, #tpu.memory_space<semaphore_mem>>) src(%229 : memref<1x128xf32, #tpu.memory_space<any>>) dst(%230 : memref<1x128xf32, #tpu.memory_space<vmem>>)
    %c6_i32_187 = arith.constant 6 : i32
    %233 = arith.addi %202, %c6_i32_187 : i32
    %c6_i32_188 = arith.constant 6 : i32
    %c0_i32_189 = arith.constant 0 : i32
    %c0_i32_190 = arith.constant 0 : i32
    %234 = tpu.memref_slice %arg2[%c0_i32_189, %c0_i32_190] : memref<1000x128xf32, #tpu.memory_space<any>> -> memref<1x128xf32, #tpu.memory_space<any>>
    %c0_i32_191 = arith.constant 0 : i32
    %235 = tpu.memref_slice %arg3[%233, %c0_i32_191] : memref<16x128xf32, #tpu.memory_space<vmem>> -> memref<1x128xf32, #tpu.memory_space<vmem>>
    %236 = tpu.memref_slice %arg4[%201, %c6_i32_188] : memref<8x8x!tpu.dma_semaphore, #tpu.memory_space<semaphore_mem>> -> memref<1x1x!tpu.dma_semaphore, #tpu.memory_space<semaphore_mem>>
    %237 = tpu.memref_squeeze %236 : memref<1x1x!tpu.dma_semaphore, #tpu.memory_space<semaphore_mem>> -> memref<!tpu.dma_semaphore, #tpu.memory_space<semaphore_mem>>
    tpu.wait_dma2 semaphore(%237 : memref<!tpu.dma_semaphore, #tpu.memory_space<semaphore_mem>>) src(%234 : memref<1x128xf32, #tpu.memory_space<any>>) dst(%235 : memref<1x128xf32, #tpu.memory_space<vmem>>)
    %c7_i32_192 = arith.constant 7 : i32
    %238 = arith.addi %202, %c7_i32_192 : i32
    %c7_i32_193 = arith.constant 7 : i32
    %c0_i32_194 = arith.constant 0 : i32
    %c0_i32_195 = arith.constant 0 : i32
    %239 = tpu.memref_slice %arg2[%c0_i32_194, %c0_i32_195] : memref<1000x128xf32, #tpu.memory_space<any>> -> memref<1x128xf32, #tpu.memory_space<any>>
    %c0_i32_196 = arith.constant 0 : i32
    %240 = tpu.memref_slice %arg3[%238, %c0_i32_196] : memref<16x128xf32, #tpu.memory_space<vmem>> -> memref<1x128xf32, #tpu.memory_space<vmem>>
    %241 = tpu.memref_slice %arg4[%201, %c7_i32_193] : memref<8x8x!tpu.dma_semaphore, #tpu.memory_space<semaphore_mem>> -> memref<1x1x!tpu.dma_semaphore, #tpu.memory_space<semaphore_mem>>
    %242 = tpu.memref_squeeze %241 : memref<1x1x!tpu.dma_semaphore, #tpu.memory_space<semaphore_mem>> -> memref<!tpu.dma_semaphore, #tpu.memory_space<semaphore_mem>>
    tpu.wait_dma2 semaphore(%242 : memref<!tpu.dma_semaphore, #tpu.memory_space<semaphore_mem>>) src(%239 : memref<1x128xf32, #tpu.memory_space<any>>) dst(%240 : memref<1x128xf32, #tpu.memory_space<vmem>>)
    %c8_i32_197 = arith.constant 8 : i32
    %243 = arith.addi %c1_i32_149, %c8_i32_197 : i32
    %c2_i32_198 = arith.constant 2 : i32
    %244 = arith.cmpi slt, %243, %c2_i32_198 : i32
    %245 = arith.extui %244 : i1 to i32
    %c0_i32_199 = arith.constant 0 : i32
    %246 = arith.cmpi ne, %245, %c0_i32_199 : i32
    scf.if %246 {
      %c8_i32_205 = arith.constant 8 : i32
      %255 = arith.addi %c1_i32_149, %c8_i32_205 : i32
      %c8_i32_206 = arith.constant 8 : i32
      %c0_i32_207 = arith.constant 0 : i32
      %256 = arith.cmpi eq, %c8_i32_206, %c0_i32_207 : i32
      %c1_i32_208 = arith.constant 1 : i32
      %257 = arith.select %256, %c1_i32_208, %c8_i32_206 : i32
      %258 = arith.remsi %255, %257 : i32
      %c0_i32_209 = arith.constant 0 : i32
      %259 = arith.cmpi ne, %258, %c0_i32_209 : i32
      %c0_i32_210 = arith.constant 0 : i32
      %260 = arith.cmpi slt, %258, %c0_i32_210 : i32
      %c0_i32_211 = arith.constant 0 : i32
      %261 = arith.cmpi slt, %257, %c0_i32_211 : i32
      %262 = arith.xori %260, %261 : i1
      %263 = arith.andi %262, %259 : i1
      %264 = arith.addi %258, %257 : i32
      %265 = arith.select %263, %264, %258 : i32
      %c8_i32_212 = arith.constant 8 : i32
      %266 = arith.muli %255, %c8_i32_212 : i32
      %267 = arith.addi %0, %266 : i32
      %c0_i32_213 = arith.constant 0 : i32
      %268 = arith.addi %267, %c0_i32_213 : i32
      %269 = arith.index_cast %268 : i32 to index
      %270 = memref.load %arg1[%269] : memref<16xi32, #tpu.memory_space<smem>>
      %c0_i32_214 = arith.constant 0 : i32
      %271 = arith.addi %266, %c0_i32_214 : i32
      %c0_i32_215 = arith.constant 0 : i32
      %c0_i32_216 = arith.constant 0 : i32
      %272 = tpu.memref_slice %arg2[%270, %c0_i32_216] : memref<1000x128xf32, #tpu.memory_space<any>> -> memref<1x128xf32, #tpu.memory_space<any>>
      %c0_i32_217 = arith.constant 0 : i32
      %273 = tpu.memref_slice %arg3[%271, %c0_i32_217] : memref<16x128xf32, #tpu.memory_space<vmem>> -> memref<1x128xf32, #tpu.memory_space<vmem>>
      %274 = tpu.memref_slice %arg4[%265, %c0_i32_215] : memref<8x8x!tpu.dma_semaphore, #tpu.memory_space<semaphore_mem>> -> memref<1x1x!tpu.dma_semaphore, #tpu.memory_space<semaphore_mem>>
      %275 = tpu.memref_squeeze %274 : memref<1x1x!tpu.dma_semaphore, #tpu.memory_space<semaphore_mem>> -> memref<!tpu.dma_semaphore, #tpu.memory_space<semaphore_mem>>
      tpu.enqueue_dma source(%272 : memref<1x128xf32, #tpu.memory_space<any>>) target(%273 : memref<1x128xf32, #tpu.memory_space<vmem>>) target_semaphore(%275 : memref<!tpu.dma_semaphore, #tpu.memory_space<semaphore_mem>>)
      %276 = arith.addi %0, %266 : i32
      %c1_i32_218 = arith.constant 1 : i32
      %277 = arith.addi %276, %c1_i32_218 : i32
      %278 = arith.index_cast %277 : i32 to index
      %279 = memref.load %arg1[%278] : memref<16xi32, #tpu.memory_space<smem>>
      %c1_i32_219 = arith.constant 1 : i32
      %280 = arith.addi %266, %c1_i32_219 : i32
      %c1_i32_220 = arith.constant 1 : i32
      %c0_i32_221 = arith.constant 0 : i32
      %281 = tpu.memref_slice %arg2[%279, %c0_i32_221] : memref<1000x128xf32, #tpu.memory_space<any>> -> memref<1x128xf32, #tpu.memory_space<any>>
      %c0_i32_222 = arith.constant 0 : i32
      %282 = tpu.memref_slice %arg3[%280, %c0_i32_222] : memref<16x128xf32, #tpu.memory_space<vmem>> -> memref<1x128xf32, #tpu.memory_space<vmem>>
      %283 = tpu.memref_slice %arg4[%265, %c1_i32_220] : memref<8x8x!tpu.dma_semaphore, #tpu.memory_space<semaphore_mem>> -> memref<1x1x!tpu.dma_semaphore, #tpu.memory_space<semaphore_mem>>
      %284 = tpu.memref_squeeze %283 : memref<1x1x!tpu.dma_semaphore, #tpu.memory_space<semaphore_mem>> -> memref<!tpu.dma_semaphore, #tpu.memory_space<semaphore_mem>>
      tpu.enqueue_dma source(%281 : memref<1x128xf32, #tpu.memory_space<any>>) target(%282 : memref<1x128xf32, #tpu.memory_space<vmem>>) target_semaphore(%284 : memref<!tpu.dma_semaphore, #tpu.memory_space<semaphore_mem>>)
      %285 = arith.addi %0, %266 : i32
      %c2_i32_223 = arith.constant 2 : i32
      %286 = arith.addi %285, %c2_i32_223 : i32
      %287 = arith.index_cast %286 : i32 to index
      %288 = memref.load %arg1[%287] : memref<16xi32, #tpu.memory_space<smem>>
      %c2_i32_224 = arith.constant 2 : i32
      %289 = arith.addi %266, %c2_i32_224 : i32
      %c2_i32_225 = arith.constant 2 : i32
      %c0_i32_226 = arith.constant 0 : i32
      %290 = tpu.memref_slice %arg2[%288, %c0_i32_226] : memref<1000x128xf32, #tpu.memory_space<any>> -> memref<1x128xf32, #tpu.memory_space<any>>
      %c0_i32_227 = arith.constant 0 : i32
      %291 = tpu.memref_slice %arg3[%289, %c0_i32_227] : memref<16x128xf32, #tpu.memory_space<vmem>> -> memref<1x128xf32, #tpu.memory_space<vmem>>
      %292 = tpu.memref_slice %arg4[%265, %c2_i32_225] : memref<8x8x!tpu.dma_semaphore, #tpu.memory_space<semaphore_mem>> -> memref<1x1x!tpu.dma_semaphore, #tpu.memory_space<semaphore_mem>>
      %293 = tpu.memref_squeeze %292 : memref<1x1x!tpu.dma_semaphore, #tpu.memory_space<semaphore_mem>> -> memref<!tpu.dma_semaphore, #tpu.memory_space<semaphore_mem>>
      tpu.enqueue_dma source(%290 : memref<1x128xf32, #tpu.memory_space<any>>) target(%291 : memref<1x128xf32, #tpu.memory_space<vmem>>) target_semaphore(%293 : memref<!tpu.dma_semaphore, #tpu.memory_space<semaphore_mem>>)
      %294 = arith.addi %0, %266 : i32
      %c3_i32_228 = arith.constant 3 : i32
      %295 = arith.addi %294, %c3_i32_228 : i32
      %296 = arith.index_cast %295 : i32 to index
      %297 = memref.load %arg1[%296] : memref<16xi32, #tpu.memory_space<smem>>
      %c3_i32_229 = arith.constant 3 : i32
      %298 = arith.addi %266, %c3_i32_229 : i32
      %c3_i32_230 = arith.constant 3 : i32
      %c0_i32_231 = arith.constant 0 : i32
      %299 = tpu.memref_slice %arg2[%297, %c0_i32_231] : memref<1000x128xf32, #tpu.memory_space<any>> -> memref<1x128xf32, #tpu.memory_space<any>>
      %c0_i32_232 = arith.constant 0 : i32
      %300 = tpu.memref_slice %arg3[%298, %c0_i32_232] : memref<16x128xf32, #tpu.memory_space<vmem>> -> memref<1x128xf32, #tpu.memory_space<vmem>>
      %301 = tpu.memref_slice %arg4[%265, %c3_i32_230] : memref<8x8x!tpu.dma_semaphore, #tpu.memory_space<semaphore_mem>> -> memref<1x1x!tpu.dma_semaphore, #tpu.memory_space<semaphore_mem>>
      %302 = tpu.memref_squeeze %301 : memref<1x1x!tpu.dma_semaphore, #tpu.memory_space<semaphore_mem>> -> memref<!tpu.dma_semaphore, #tpu.memory_space<semaphore_mem>>
      tpu.enqueue_dma source(%299 : memref<1x128xf32, #tpu.memory_space<any>>) target(%300 : memref<1x128xf32, #tpu.memory_space<vmem>>) target_semaphore(%302 : memref<!tpu.dma_semaphore, #tpu.memory_space<semaphore_mem>>)
      %303 = arith.addi %0, %266 : i32
      %c4_i32_233 = arith.constant 4 : i32
      %304 = arith.addi %303, %c4_i32_233 : i32
      %305 = arith.index_cast %304 : i32 to index
      %306 = memref.load %arg1[%305] : memref<16xi32, #tpu.memory_space<smem>>
      %c4_i32_234 = arith.constant 4 : i32
      %307 = arith.addi %266, %c4_i32_234 : i32
      %c4_i32_235 = arith.constant 4 : i32
      %c0_i32_236 = arith.constant 0 : i32
      %308 = tpu.memref_slice %arg2[%306, %c0_i32_236] : memref<1000x128xf32, #tpu.memory_space<any>> -> memref<1x128xf32, #tpu.memory_space<any>>
      %c0_i32_237 = arith.constant 0 : i32
      %309 = tpu.memref_slice %arg3[%307, %c0_i32_237] : memref<16x128xf32, #tpu.memory_space<vmem>> -> memref<1x128xf32, #tpu.memory_space<vmem>>
      %310 = tpu.memref_slice %arg4[%265, %c4_i32_235] : memref<8x8x!tpu.dma_semaphore, #tpu.memory_space<semaphore_mem>> -> memref<1x1x!tpu.dma_semaphore, #tpu.memory_space<semaphore_mem>>
      %311 = tpu.memref_squeeze %310 : memref<1x1x!tpu.dma_semaphore, #tpu.memory_space<semaphore_mem>> -> memref<!tpu.dma_semaphore, #tpu.memory_space<semaphore_mem>>
      tpu.enqueue_dma source(%308 : memref<1x128xf32, #tpu.memory_space<any>>) target(%309 : memref<1x128xf32, #tpu.memory_space<vmem>>) target_semaphore(%311 : memref<!tpu.dma_semaphore, #tpu.memory_space<semaphore_mem>>)
      %312 = arith.addi %0, %266 : i32
      %c5_i32_238 = arith.constant 5 : i32
      %313 = arith.addi %312, %c5_i32_238 : i32
      %314 = arith.index_cast %313 : i32 to index
      %315 = memref.load %arg1[%314] : memref<16xi32, #tpu.memory_space<smem>>
      %c5_i32_239 = arith.constant 5 : i32
      %316 = arith.addi %266, %c5_i32_239 : i32
      %c5_i32_240 = arith.constant 5 : i32
      %c0_i32_241 = arith.constant 0 : i32
      %317 = tpu.memref_slice %arg2[%315, %c0_i32_241] : memref<1000x128xf32, #tpu.memory_space<any>> -> memref<1x128xf32, #tpu.memory_space<any>>
      %c0_i32_242 = arith.constant 0 : i32
      %318 = tpu.memref_slice %arg3[%316, %c0_i32_242] : memref<16x128xf32, #tpu.memory_space<vmem>> -> memref<1x128xf32, #tpu.memory_space<vmem>>
      %319 = tpu.memref_slice %arg4[%265, %c5_i32_240] : memref<8x8x!tpu.dma_semaphore, #tpu.memory_space<semaphore_mem>> -> memref<1x1x!tpu.dma_semaphore, #tpu.memory_space<semaphore_mem>>
      %320 = tpu.memref_squeeze %319 : memref<1x1x!tpu.dma_semaphore, #tpu.memory_space<semaphore_mem>> -> memref<!tpu.dma_semaphore, #tpu.memory_space<semaphore_mem>>
      tpu.enqueue_dma source(%317 : memref<1x128xf32, #tpu.memory_space<any>>) target(%318 : memref<1x128xf32, #tpu.memory_space<vmem>>) target_semaphore(%320 : memref<!tpu.dma_semaphore, #tpu.memory_space<semaphore_mem>>)
      %321 = arith.addi %0, %266 : i32
      %c6_i32_243 = arith.constant 6 : i32
      %322 = arith.addi %321, %c6_i32_243 : i32
      %323 = arith.index_cast %322 : i32 to index
      %324 = memref.load %arg1[%323] : memref<16xi32, #tpu.memory_space<smem>>
      %c6_i32_244 = arith.constant 6 : i32
      %325 = arith.addi %266, %c6_i32_244 : i32
      %c6_i32_245 = arith.constant 6 : i32
      %c0_i32_246 = arith.constant 0 : i32
      %326 = tpu.memref_slice %arg2[%324, %c0_i32_246] : memref<1000x128xf32, #tpu.memory_space<any>> -> memref<1x128xf32, #tpu.memory_space<any>>
      %c0_i32_247 = arith.constant 0 : i32
      %327 = tpu.memref_slice %arg3[%325, %c0_i32_247] : memref<16x128xf32, #tpu.memory_space<vmem>> -> memref<1x128xf32, #tpu.memory_space<vmem>>
      %328 = tpu.memref_slice %arg4[%265, %c6_i32_245] : memref<8x8x!tpu.dma_semaphore, #tpu.memory_space<semaphore_mem>> -> memref<1x1x!tpu.dma_semaphore, #tpu.memory_space<semaphore_mem>>
      %329 = tpu.memref_squeeze %328 : memref<1x1x!tpu.dma_semaphore, #tpu.memory_space<semaphore_mem>> -> memref<!tpu.dma_semaphore, #tpu.memory_space<semaphore_mem>>
      tpu.enqueue_dma source(%326 : memref<1x128xf32, #tpu.memory_space<any>>) target(%327 : memref<1x128xf32, #tpu.memory_space<vmem>>) target_semaphore(%329 : memref<!tpu.dma_semaphore, #tpu.memory_space<semaphore_mem>>)
      %330 = arith.addi %0, %266 : i32
      %c7_i32_248 = arith.constant 7 : i32
      %331 = arith.addi %330, %c7_i32_248 : i32
      %332 = arith.index_cast %331 : i32 to index
      %333 = memref.load %arg1[%332] : memref<16xi32, #tpu.memory_space<smem>>
      %c7_i32_249 = arith.constant 7 : i32
      %334 = arith.addi %266, %c7_i32_249 : i32
      %c7_i32_250 = arith.constant 7 : i32
      %c0_i32_251 = arith.constant 0 : i32
      %335 = tpu.memref_slice %arg2[%333, %c0_i32_251] : memref<1000x128xf32, #tpu.memory_space<any>> -> memref<1x128xf32, #tpu.memory_space<any>>
      %c0_i32_252 = arith.constant 0 : i32
      %336 = tpu.memref_slice %arg3[%334, %c0_i32_252] : memref<16x128xf32, #tpu.memory_space<vmem>> -> memref<1x128xf32, #tpu.memory_space<vmem>>
      %337 = tpu.memref_slice %arg4[%265, %c7_i32_250] : memref<8x8x!tpu.dma_semaphore, #tpu.memory_space<semaphore_mem>> -> memref<1x1x!tpu.dma_semaphore, #tpu.memory_space<semaphore_mem>>
      %338 = tpu.memref_squeeze %337 : memref<1x1x!tpu.dma_semaphore, #tpu.memory_space<semaphore_mem>> -> memref<!tpu.dma_semaphore, #tpu.memory_space<semaphore_mem>>
      tpu.enqueue_dma source(%335 : memref<1x128xf32, #tpu.memory_space<any>>) target(%336 : memref<1x128xf32, #tpu.memory_space<vmem>>) target_semaphore(%338 : memref<!tpu.dma_semaphore, #tpu.memory_space<semaphore_mem>>)
    } else {
    }
    %c8_i32_200 = arith.constant 8 : i32
    %247 = arith.muli %c1_i32_149, %c8_i32_200 : i32
    %248 = tpu.assume_multiple %247, 8 : i32
    %249 = arith.index_cast %248 : i32 to index
    %c0_201 = arith.constant 0 : index
    %250 = vector.load %arg3[%249, %c0_201] : memref<16x128xf32, #tpu.memory_space<vmem>>, vector<8x128xf32>
    %cst_202 = arith.constant 11.3137083 : f32
    %251 = vector.broadcast %cst_202 : f32 to vector<8x128xf32>
    %252 = arith.mulf %250, %251 : vector<8x128xf32>
    %253 = arith.index_cast %248 : i32 to index
    %c0_203 = arith.constant 0 : index
    %254 = vector.load %arg3[%253, %c0_203] : memref<16x128xf32, #tpu.memory_space<vmem>>, vector<8x128xf32>
    tpu.vector_store %arg3[%253, %c0_203], %252 {strides = array<i32>} : memref<16x128xf32, #tpu.memory_space<vmem>>, vector<8x128xf32>,
    %c2_i32_204 = arith.constant 2 : i32
    return
  }
  func.func @transform_1(%arg0: i32, %arg1: memref<16xi32, #tpu.memory_space<smem>>) -> (i32, i32) {
    %c0_i32 = arith.constant 0 : i32
    %c0_i32_0 = arith.constant 0 : i32
    return %arg0, %c0_i32 : i32, i32
  }
}

</mosaic_0001>

<llo_original>
// kernel: tpu_custom_call.1
$region0: #{tpu_custom_call.1}
  #allocation0 [shape = 'u32[]', space=smem, size = 0x4, offset = 0x4, fixed_abs, tag = 'smem constant byte address 0x4 - core index']
  #allocation1 [shape = 'u32[72,128]{1,0:T(1,128)}', space=vmem, size = 0x9000, scoped, tag = 'internal scratch']
  #allocation2 [shape = 's32[64]{0}', space=sflag, size = 0x100, scoped, tag = 'scratch operand']
  #allocation3 [shape = 's32[1]{0}', space=sflag, size = 0x4, scoped, tag = 'scoped memory for tpu_custom_call.1']
  #allocation4 [shape = 'u8[512]{0}', space=smem, size = 0x200, scoped, tag = 'prefetched SMEM operand 0']
  #allocation7 [shape = 's32[]', space=sflag, size = 0x4, offset = 0, fixed_abs, tag = 'sflag constant byte address 0x0 - dummy sync flag']
  #allocation8 [shape = 's32[]', space=sflag, size = 0x4, offset = 0, fixed_abs, tag = 'sflag constant byte address 0x0 - dummy sync flag']
  #allocation9 [shape = 'u32[]', space=smem, size = 0x4, offset = 0x44, fixed_abs, tag = 'smem constant byte address 0x44 - assertion arg 0']
  #allocation10 [shape = 'u32[]', space=smem, size = 0x4, offset = 0x48, fixed_abs, tag = 'smem constant byte address 0x48 - assertion arg 1']
  #allocation11 [shape = 's32[]', space=sflag, size = 0x4, offset = 0, fixed_abs, tag = 'sflag constant byte address 0x0 - dummy sync flag']
  #allocation12 [shape = 's32[]', space=sflag, size = 0x4, offset = 0, fixed_abs, tag = 'sflag constant byte address 0x0 - dummy sync flag']
  #allocation13 [shape = 's32[]', space=sflag, size = 0x4, offset = 0, fixed_abs, tag = 'sflag constant byte address 0x0 - dummy sync flag']
  #allocation14 [shape = 's32[]', space=sflag, size = 0x4, offset = 0, fixed_abs, tag = 'sflag constant byte address 0x0 - dummy sync flag']
  #allocation15 [shape = 's32[]', space=sflag, size = 0x4, offset = 0, fixed_abs, tag = 'sflag constant byte address 0x0 - dummy sync flag']
  #allocation16 [shape = 's32[]', space=sflag, size = 0x4, offset = 0, fixed_abs, tag = 'sflag constant byte address 0x0 - dummy sync flag']
  #allocation17 [shape = 's32[]', space=sflag, size = 0x4, offset = 0, fixed_abs, tag = 'sflag constant byte address 0x0 - dummy sync flag']
  #allocation18 [shape = 's32[]', space=sflag, size = 0x4, offset = 0, fixed_abs, tag = 'sflag constant byte address 0x0 - dummy sync flag']
  #allocation19 [shape = 's32[]', space=sflag, size = 0x4, offset = 0, fixed_abs, tag = 'sflag constant byte address 0x0 - dummy sync flag']
  #allocation20 [shape = 's32[]', space=sflag, size = 0x4, offset = 0, fixed_abs, tag = 'sflag constant byte address 0x0 - dummy sync flag']
  #allocation21 [shape = 's32[]', space=sflag, size = 0x4, offset = 0, fixed_abs, tag = 'sflag constant byte address 0x0 - dummy sync flag']
  #allocation22 [shape = 's32[]', space=sflag, size = 0x4, offset = 0, fixed_abs, tag = 'sflag constant byte address 0x0 - dummy sync flag']
  #allocation23 [shape = 's32[]', space=sflag, size = 0x4, offset = 0, fixed_abs, tag = 'sflag constant byte address 0x0 - dummy sync flag']
  #allocation24 [shape = 's32[]', space=sflag, size = 0x4, offset = 0, fixed_abs, tag = 'sflag constant byte address 0x0 - dummy sync flag']
  #allocation25 [shape = 's32[]', space=sflag, size = 0x4, offset = 0, fixed_abs, tag = 'sflag constant byte address 0x0 - dummy sync flag']
  #allocation26 [shape = 's32[]', space=sflag, size = 0x4, offset = 0, fixed_abs, tag = 'sflag constant byte address 0x0 - dummy sync flag']
  #allocation27 [shape = 's32[]', space=sflag, size = 0x4, offset = 0, fixed_abs, tag = 'sflag constant byte address 0x0 - dummy sync flag']
  #allocation28 [shape = 's32[]', space=sflag, size = 0x4, offset = 0, fixed_abs, tag = 'sflag constant byte address 0x0 - dummy sync flag']
  #allocation29 [shape = 's32[]', space=sflag, size = 0x4, offset = 0, fixed_abs, tag = 'sflag constant byte address 0x0 - dummy sync flag']
  #allocation30 [shape = 's32[]', space=sflag, size = 0x4, offset = 0, fixed_abs, tag = 'sflag constant byte address 0x0 - dummy sync flag']
  #allocation31 [shape = 's32[]', space=sflag, size = 0x4, offset = 0, fixed_abs, tag = 'sflag constant byte address 0x0 - dummy sync flag']
  #allocation32 [shape = 's32[]', space=sflag, size = 0x4, offset = 0, fixed_abs, tag = 'sflag constant byte address 0x0 - dummy sync flag']
  #allocation33 [shape = 's32[]', space=sflag, size = 0x4, offset = 0, fixed_abs, tag = 'sflag constant byte address 0x0 - dummy sync flag']
  #allocation34 [shape = 's32[]', space=sflag, size = 0x4, offset = 0, fixed_abs, tag = 'sflag constant byte address 0x0 - dummy sync flag']
  #allocation35 [shape = 's32[]', space=sflag, size = 0x4, offset = 0, fixed_abs, tag = 'sflag constant byte address 0x0 - dummy sync flag']
  #allocation36 [shape = 's32[]', space=sflag, size = 0x4, offset = 0, fixed_abs, tag = 'sflag constant byte address 0x0 - dummy sync flag']
  #allocation37 [shape = 's32[]', space=sflag, size = 0x4, offset = 0, fixed_abs, tag = 'sflag constant byte address 0x0 - dummy sync flag']
  #allocation38 [shape = 's32[]', space=sflag, size = 0x4, offset = 0, fixed_abs, tag = 'sflag constant byte address 0x0 - dummy sync flag']
  #allocation39 [shape = 's32[]', space=sflag, size = 0x4, offset = 0, fixed_abs, tag = 'sflag constant byte address 0x0 - dummy sync flag']
  #allocation40 [shape = 's32[]', space=sflag, size = 0x4, offset = 0, fixed_abs, tag = 'sflag constant byte address 0x0 - dummy sync flag']
  %s0 = inlined_call_operand.hbm [shape: s32[16], index: 0, kind: input, shape index: {}]
  %s1 = inlined_call_operand.hbm [shape: f32[1000,128], index: 1, kind: input, shape index: {}]
  %s2 = inlined_call_operand.hbm [shape: f32[16,128], index: 2, kind: output, shape index: {}]
  %s3 = sld [smem:[#allocation0]]
  $region74: #{tpu_custom_call.1} parent=0
    _
  %s5 = ssub.s32 1, %s3
  %s6 = scalar_select 0, %s5, %s3
  %s8 = sshll.u32 %s0, 4
  %s9 = int_to_ptr.hbm [resolvable:$true] %s8
  %11 = dma.hbm_to_smem %s9, 16, [#allocation4], [#allocation3]
  %13 = dma.done [#allocation3], 16
  %14 = sfence
  $region1: #{tpu_custom_call.1} parent=0
    #allocation5 [shape = 'u8[8192]{0}', space=vmem, size = 0x2000, scoped, tag = 'output window, operand 0, single buffered']
    #allocation6 [shape = 's32[1]{0}', space=sflag, size = 0x4, scoped, tag = 'scoped memory for tpu_custom_call.1']
    %15 = vsyncpa [#allocation6], 0
    %s16 = smul.u32 0, 16
    %s17 = sld [smem:[#allocation4 + %s16]]
    %s18 = scalar_lea.hbm %s1, %s17
    // Predicated region
    $region2: #{tpu_custom_call.1} parent=1 // pred_check
      _
    $region3: #{tpu_custom_call.1} parent=1 // pred_check_branch
      %20 = sbr.rel target = $region5
    $region4: #{tpu_custom_call.1} parent=1 // pred_region
      %21 = sst [smem:[#allocation9]] [#allocation8]
      %22 = sst [smem:[#allocation10]] [#allocation7]
    $region5: #{tpu_custom_call.1} parent=1 // pred_fallthru
      _
    %24 = shalt.err (0)
    %s26 = sshll.u32 %s18, 4
    %s27 = int_to_ptr.hbm [resolvable:$true] %s26
    %s28 = sshll.u32 [#allocation5], 4
    %s29 = int_to_ptr.vmem [resolvable:$true] %s28
    %31 = dma.hbm_to_vmem [thread:$0]  %s27, 16, %s29, [#allocation2]
    %s32 = sadd.s32 %s16, 1
    %s33 = sld [smem:[#allocation4 + %s32]]
    %s34 = scalar_lea.hbm %s1, %s33
    %s35 = scalar_lea.vmem [#allocation5], 1
    %s36 = scalar_lea.sflag [#allocation2], 1
    // Predicated region
    $region6: #{tpu_custom_call.1} parent=1 // pred_check
      _
    $region7: #{tpu_custom_call.1} parent=1 // pred_check_branch
      %38 = sbr.rel target = $region9
    $region8: #{tpu_custom_call.1} parent=1 // pred_region
      %39 = sst [smem:[#allocation9]] [#allocation12]
      %40 = sst [smem:[#allocation10]] [#allocation11]
    $region9: #{tpu_custom_call.1} parent=1 // pred_fallthru
      _
    %42 = shalt.err (0)
    %s44 = sshll.u32 %s34, 4
    %s45 = int_to_ptr.hbm [resolvable:$true] %s44
    %s46 = sshll.u32 %s35, 4
    %s47 = int_to_ptr.vmem [resolvable:$true] %s46
    %49 = dma.hbm_to_vmem [thread:$0]  %s45, 16, %s47, %s36
    %s50 = sadd.s32 %s16, 2
    %s51 = sld [smem:[#allocation4 + %s50]]
    %s52 = scalar_lea.hbm %s1, %s51
    %s53 = scalar_lea.vmem [#allocation5], 2
    %s54 = scalar_lea.sflag [#allocation2], 2
    // Predicated region
    $region10: #{tpu_custom_call.1} parent=1 // pred_check
      _
    $region11: #{tpu_custom_call.1} parent=1 // pred_check_branch
      %56 = sbr.rel target = $region13
    $region12: #{tpu_custom_call.1} parent=1 // pred_region
      %57 = sst [smem:[#allocation9]] [#allocation14]
      %58 = sst [smem:[#allocation10]] [#allocation13]
    $region13: #{tpu_custom_call.1} parent=1 // pred_fallthru
      _
    %60 = shalt.err (0)
    %s62 = sshll.u32 %s52, 4
    %s63 = int_to_ptr.hbm [resolvable:$true] %s62
    %s64 = sshll.u32 %s53, 4
    %s65 = int_to_ptr.vmem [resolvable:$true] %s64
    %67 = dma.hbm_to_vmem [thread:$0]  %s63, 16, %s65, %s54
    %s68 = sadd.s32 %s16, 3
    %s69 = sld [smem:[#allocation4 + %s68]]
    %s70 = scalar_lea.hbm %s1, %s69
    %s71 = scalar_lea.vmem [#allocation5], 3
    %s72 = scalar_lea.sflag [#allocation2], 3
    // Predicated region
    $region14: #{tpu_custom_call.1} parent=1 // pred_check
      _
    $region15: #{tpu_custom_call.1} parent=1 // pred_check_branch
      %74 = sbr.rel target = $region17
    $region16: #{tpu_custom_call.1} parent=1 // pred_region
      %75 = sst [smem:[#allocation9]] [#allocation16]
      %76 = sst [smem:[#allocation10]] [#allocation15]
    $region17: #{tpu_custom_call.1} parent=1 // pred_fallthru
      _
    %78 = shalt.err (0)
    %s80 = sshll.u32 %s70, 4
    %s81 = int_to_ptr.hbm [resolvable:$true] %s80
    %s82 = sshll.u32 %s71, 4
    %s83 = int_to_ptr.vmem [resolvable:$true] %s82
    %85 = dma.hbm_to_vmem [thread:$0]  %s81, 16, %s83, %s72
    %s86 = sadd.s32 %s16, 4
    %s87 = sld [smem:[#allocation4 + %s86]]
    %s88 = scalar_lea.hbm %s1, %s87
    %s89 = scalar_lea.vmem [#allocation5], 4
    %s90 = scalar_lea.sflag [#allocation2], 4
    // Predicated region
    $region18: #{tpu_custom_call.1} parent=1 // pred_check
      _
    $region19: #{tpu_custom_call.1} parent=1 // pred_check_branch
      %92 = sbr.rel target = $region21
    $region20: #{tpu_custom_call.1} parent=1 // pred_region
      %93 = sst [smem:[#allocation9]] [#allocation18]
      %94 = sst [smem:[#allocation10]] [#allocation17]
    $region21: #{tpu_custom_call.1} parent=1 // pred_fallthru
      _
    %96 = shalt.err (0)
    %s98 = sshll.u32 %s88, 4
    %s99 = int_to_ptr.hbm [resolvable:$true] %s98
    %s100 = sshll.u32 %s89, 4
    %s101 = int_to_ptr.vmem [resolvable:$true] %s100
    %103 = dma.hbm_to_vmem [thread:$0]  %s99, 16, %s101, %s90
    %s104 = sadd.s32 %s16, 5
    %s105 = sld [smem:[#allocation4 + %s104]]
    %s106 = scalar_lea.hbm %s1, %s105
    %s107 = scalar_lea.vmem [#allocation5], 5
    %s108 = scalar_lea.sflag [#allocation2], 5
    // Predicated region
    $region22: #{tpu_custom_call.1} parent=1 // pred_check
      _
    $region23: #{tpu_custom_call.1} parent=1 // pred_check_branch
      %110 = sbr.rel target = $region25
    $region24: #{tpu_custom_call.1} parent=1 // pred_region
      %111 = sst [smem:[#allocation9]] [#allocation20]
      %112 = sst [smem:[#allocation10]] [#allocation19]
    $region25: #{tpu_custom_call.1} parent=1 // pred_fallthru
      _
    %114 = shalt.err (0)
    %s116 = sshll.u32 %s106, 4
    %s117 = int_to_ptr.hbm [resolvable:$true] %s116
    %s118 = sshll.u32 %s107, 4
    %s119 = int_to_ptr.vmem [resolvable:$true] %s118
    %121 = dma.hbm_to_vmem [thread:$0]  %s117, 16, %s119, %s108
    %s122 = sadd.s32 %s16, 6
    %s123 = sld [smem:[#allocation4 + %s122]]
    %s124 = scalar_lea.hbm %s1, %s123
    %s125 = scalar_lea.vmem [#allocation5], 6
    %s126 = scalar_lea.sflag [#allocation2], 6
    // Predicated region
    $region26: #{tpu_custom_call.1} parent=1 // pred_check
      _
    $region27: #{tpu_custom_call.1} parent=1 // pred_check_branch
      %128 = sbr.rel target = $region29
    $region28: #{tpu_custom_call.1} parent=1 // pred_region
      %129 = sst [smem:[#allocation9]] [#allocation22]
      %130 = sst [smem:[#allocation10]] [#allocation21]
    $region29: #{tpu_custom_call.1} parent=1 // pred_fallthru
      _
    %132 = shalt.err (0)
    %s134 = sshll.u32 %s124, 4
    %s135 = int_to_ptr.hbm [resolvable:$true] %s134
    %s136 = sshll.u32 %s125, 4
    %s137 = int_to_ptr.vmem [resolvable:$true] %s136
    %139 = dma.hbm_to_vmem [thread:$0]  %s135, 16, %s137, %s126
    %s140 = sadd.s32 %s16, 7
    %s141 = sld [smem:[#allocation4 + %s140]]
    %s142 = scalar_lea.hbm %s1, %s141
    %s143 = scalar_lea.vmem [#allocation5], 7
    %s144 = scalar_lea.sflag [#allocation2], 7
    // Predicated region
    $region30: #{tpu_custom_call.1} parent=1 // pred_check
      _
    $region31: #{tpu_custom_call.1} parent=1 // pred_check_branch
      %146 = sbr.rel target = $region33
    $region32: #{tpu_custom_call.1} parent=1 // pred_region
      %147 = sst [smem:[#allocation9]] [#allocation24]
      %148 = sst [smem:[#allocation10]] [#allocation23]
    $region33: #{tpu_custom_call.1} parent=1 // pred_fallthru
      _
    %150 = shalt.err (0)
    %s152 = sshll.u32 %s142, 4
    %s153 = int_to_ptr.hbm [resolvable:$true] %s152
    %s154 = sshll.u32 %s143, 4
    %s155 = int_to_ptr.vmem [resolvable:$true] %s154
    %157 = dma.hbm_to_vmem [thread:$0]  %s153, 16, %s155, %s144
    %s158 = sadd.s32 %s16, 8
    %s159 = sld [smem:[#allocation4 + %s158]]
    %s160 = scalar_lea.hbm %s1, %s159
    %s161 = scalar_lea.vmem [#allocation5], 8
    %s162 = scalar_lea.sflag [#allocation2], 8
    // Predicated region
    $region34: #{tpu_custom_call.1} parent=1 // pred_check
      _
    $region35: #{tpu_custom_call.1} parent=1 // pred_check_branch
      %164 = sbr.rel target = $region37
    $region36: #{tpu_custom_call.1} parent=1 // pred_region
      %165 = sst [smem:[#allocation9]] [#allocation26]
      %166 = sst [smem:[#allocation10]] [#allocation25]
    $region37: #{tpu_custom_call.1} parent=1 // pred_fallthru
      _
    %168 = shalt.err (0)
    %s170 = sshll.u32 %s160, 4
    %s171 = int_to_ptr.hbm [resolvable:$true] %s170
    %s172 = sshll.u32 %s161, 4
    %s173 = int_to_ptr.vmem [resolvable:$true] %s172
    %175 = dma.hbm_to_vmem [thread:$0]  %s171, 16, %s173, %s162
    %s176 = sadd.s32 %s16, 9
    %s177 = sld [smem:[#allocation4 + %s176]]
    %s178 = scalar_lea.hbm %s1, %s177
    %s179 = scalar_lea.vmem [#allocation5], 9
    %s180 = scalar_lea.sflag [#allocation2], 9
    // Predicated region
    $region38: #{tpu_custom_call.1} parent=1 // pred_check
      _
    $region39: #{tpu_custom_call.1} parent=1 // pred_check_branch
      %182 = sbr.rel target = $region41
    $region40: #{tpu_custom_call.1} parent=1 // pred_region
      %183 = sst [smem:[#allocation9]] [#allocation28]
      %184 = sst [smem:[#allocation10]] [#allocation27]
    $region41: #{tpu_custom_call.1} parent=1 // pred_fallthru
      _
    %186 = shalt.err (0)
    %s188 = sshll.u32 %s178, 4
    %s189 = int_to_ptr.hbm [resolvable:$true] %s188
    %s190 = sshll.u32 %s179, 4
    %s191 = int_to_ptr.vmem [resolvable:$true] %s190
    %193 = dma.hbm_to_vmem [thread:$0]  %s189, 16, %s191, %s180
    %s194 = sadd.s32 %s16, 10
    %s195 = sld [smem:[#allocation4 + %s194]]
    %s196 = scalar_lea.hbm %s1, %s195
    %s197 = scalar_lea.vmem [#allocation5], 10
    %s198 = scalar_lea.sflag [#allocation2], 10
    // Predicated region
    $region42: #{tpu_custom_call.1} parent=1 // pred_check
      _
    $region43: #{tpu_custom_call.1} parent=1 // pred_check_branch
      %200 = sbr.rel target = $region45
    $region44: #{tpu_custom_call.1} parent=1 // pred_region
      %201 = sst [smem:[#allocation9]] [#allocation30]
      %202 = sst [smem:[#allocation10]] [#allocation29]
    $region45: #{tpu_custom_call.1} parent=1 // pred_fallthru
      _
    %204 = shalt.err (0)
    %s206 = sshll.u32 %s196, 4
    %s207 = int_to_ptr.hbm [resolvable:$true] %s206
    %s208 = sshll.u32 %s197, 4
    %s209 = int_to_ptr.vmem [resolvable:$true] %s208
    %211 = dma.hbm_to_vmem [thread:$0]  %s207, 16, %s209, %s198
    %s212 = sadd.s32 %s16, 11
    %s213 = sld [smem:[#allocation4 + %s212]]
    %s214 = scalar_lea.hbm %s1, %s213
    %s215 = scalar_lea.vmem [#allocation5], 11
    %s216 = scalar_lea.sflag [#allocation2], 11
    // Predicated region
    $region46: #{tpu_custom_call.1} parent=1 // pred_check
      _
    $region47: #{tpu_custom_call.1} parent=1 // pred_check_branch
      %218 = sbr.rel target = $region49
    $region48: #{tpu_custom_call.1} parent=1 // pred_region
      %219 = sst [smem:[#allocation9]] [#allocation32]
      %220 = sst [smem:[#allocation10]] [#allocation31]
    $region49: #{tpu_custom_call.1} parent=1 // pred_fallthru
      _
    %222 = shalt.err (0)
    %s224 = sshll.u32 %s214, 4
    %s225 = int_to_ptr.hbm [resolvable:$true] %s224
    %s226 = sshll.u32 %s215, 4
    %s227 = int_to_ptr.vmem [resolvable:$true] %s226
    %229 = dma.hbm_to_vmem [thread:$0]  %s225, 16, %s227, %s216
    %s230 = sadd.s32 %s16, 12
    %s231 = sld [smem:[#allocation4 + %s230]]
    %s232 = scalar_lea.hbm %s1, %s231
    %s233 = scalar_lea.vmem [#allocation5], 12
    %s234 = scalar_lea.sflag [#allocation2], 12
    // Predicated region
    $region50: #{tpu_custom_call.1} parent=1 // pred_check
      _
    $region51: #{tpu_custom_call.1} parent=1 // pred_check_branch
      %236 = sbr.rel target = $region53
    $region52: #{tpu_custom_call.1} parent=1 // pred_region
      %237 = sst [smem:[#allocation9]] [#allocation34]
      %238 = sst [smem:[#allocation10]] [#allocation33]
    $region53: #{tpu_custom_call.1} parent=1 // pred_fallthru
      _
    %240 = shalt.err (0)
    %s242 = sshll.u32 %s232, 4
    %s243 = int_to_ptr.hbm [resolvable:$true] %s242
    %s244 = sshll.u32 %s233, 4
    %s245 = int_to_ptr.vmem [resolvable:$true] %s244
    %247 = dma.hbm_to_vmem [thread:$0]  %s243, 16, %s245, %s234
    %s248 = sadd.s32 %s16, 13
    %s249 = sld [smem:[#allocation4 + %s248]]
    %s250 = scalar_lea.hbm %s1, %s249
    %s251 = scalar_lea.vmem [#allocation5], 13
    %s252 = scalar_lea.sflag [#allocation2], 13
    // Predicated region
    $region54: #{tpu_custom_call.1} parent=1 // pred_check
      _
    $region55: #{tpu_custom_call.1} parent=1 // pred_check_branch
      %254 = sbr.rel target = $region57
    $region56: #{tpu_custom_call.1} parent=1 // pred_region
      %255 = sst [smem:[#allocation9]] [#allocation36]
      %256 = sst [smem:[#allocation10]] [#allocation35]
    $region57: #{tpu_custom_call.1} parent=1 // pred_fallthru
      _
    %258 = shalt.err (0)
    %s260 = sshll.u32 %s250, 4
    %s261 = int_to_ptr.hbm [resolvable:$true] %s260
    %s262 = sshll.u32 %s251, 4
    %s263 = int_to_ptr.vmem [resolvable:$true] %s262
    %265 = dma.hbm_to_vmem [thread:$0]  %s261, 16, %s263, %s252
    %s266 = sadd.s32 %s16, 14
    %s267 = sld [smem:[#allocation4 + %s266]]
    %s268 = scalar_lea.hbm %s1, %s267
    %s269 = scalar_lea.vmem [#allocation5], 14
    %s270 = scalar_lea.sflag [#allocation2], 14
    // Predicated region
    $region58: #{tpu_custom_call.1} parent=1 // pred_check
      _
    $region59: #{tpu_custom_call.1} parent=1 // pred_check_branch
      %272 = sbr.rel target = $region61
    $region60: #{tpu_custom_call.1} parent=1 // pred_region
      %273 = sst [smem:[#allocation9]] [#allocation38]
      %274 = sst [smem:[#allocation10]] [#allocation37]
    $region61: #{tpu_custom_call.1} parent=1 // pred_fallthru
      _
    %276 = shalt.err (0)
    %s278 = sshll.u32 %s268, 4
    %s279 = int_to_ptr.hbm [resolvable:$true] %s278
    %s280 = sshll.u32 %s269, 4
    %s281 = int_to_ptr.vmem [resolvable:$true] %s280
    %283 = dma.hbm_to_vmem [thread:$0]  %s279, 16, %s281, %s270
    %s284 = sadd.s32 %s16, 15
    %s285 = sld [smem:[#allocation4 + %s284]]
    %s286 = scalar_lea.hbm %s1, %s285
    %s287 = scalar_lea.vmem [#allocation5], 15
    %s288 = scalar_lea.sflag [#allocation2], 15
    // Predicated region
    $region62: #{tpu_custom_call.1} parent=1 // pred_check
      _
    $region63: #{tpu_custom_call.1} parent=1 // pred_check_branch
      %290 = sbr.rel target = $region65
    $region64: #{tpu_custom_call.1} parent=1 // pred_region
      %291 = sst [smem:[#allocation9]] [#allocation40]
      %292 = sst [smem:[#allocation10]] [#allocation39]
    $region65: #{tpu_custom_call.1} parent=1 // pred_fallthru
      _
    %294 = shalt.err (0)
    %s296 = sshll.u32 %s286, 4
    %s297 = int_to_ptr.hbm [resolvable:$true] %s296
    %s298 = sshll.u32 %s287, 4
    %s299 = int_to_ptr.vmem [resolvable:$true] %s298
    %301 = dma.hbm_to_vmem [thread:$0]  %s297, 16, %s299, %s288
    %s302 = smul.u32 1, 1
    %s303 = sshll.u32 %s302, 4
    %304 = dma.done [#allocation2], %s303
    %s305 = sshll.u32 %s302, 4
    %306 = dma.done %s36, %s305
    %s307 = sshll.u32 %s302, 4
    %308 = dma.done %s54, %s307
    %s309 = sshll.u32 %s302, 4
    %310 = dma.done %s72, %s309
    %s311 = sshll.u32 %s302, 4
    %312 = dma.done %s90, %s311
    %s313 = sshll.u32 %s302, 4
    %314 = dma.done %s108, %s313
    %s315 = sshll.u32 %s302, 4
    %316 = dma.done %s126, %s315
    %s317 = sshll.u32 %s302, 4
    %318 = dma.done %s144, %s317
    %v319 = vld [vmem:[#allocation5] sm:$0xff]
    %v320 = vmul.f32 %v319, 11.313708
    %321 = vst [vmem:[#allocation5] sm:$0xff] %v320
    %s322 = sshll.u32 %s302, 4
    %323 = dma.done %s162, %s322
    %s324 = sshll.u32 %s302, 4
    %325 = dma.done %s180, %s324
    %s326 = sshll.u32 %s302, 4
    %327 = dma.done %s198, %s326
    %s328 = sshll.u32 %s302, 4
    %329 = dma.done %s216, %s328
    %s330 = sshll.u32 %s302, 4
    %331 = dma.done %s234, %s330
    %s332 = sshll.u32 %s302, 4
    %333 = dma.done %s252, %s332
    %s334 = sshll.u32 %s302, 4
    %335 = dma.done %s270, %s334
    %s336 = sshll.u32 %s302, 4
    %337 = dma.done %s288, %s336
    %s338 = scalar_lea.vmem [#allocation5], 8
    %v339 = vld [vmem:[%s338] sm:$0xff]
    %v340 = vmul.f32 %v339, 11.313708
    %341 = vst [vmem:[%s338] sm:$0xff] %v340
    // Predicated region
    $region66: #{tpu_custom_call.1} parent=1 // pred_check
      _
    $region67: #{tpu_custom_call.1} parent=1 // pred_check_branch
      %343 = sbr.rel (0) target = $region69
    $region68: #{tpu_custom_call.1} parent=1 // pred_region
      %345 = vsyncadd [#allocation6], 0
      %s346 = sshll.u32 [#allocation5], 4
      %s347 = int_to_ptr.vmem [resolvable:$true] %s346
      %s348 = sshll.u32 %s2, 4
      %s349 = int_to_ptr.hbm [resolvable:$true] %s348
      %354 = dma.vmem_to_hbm [thread:$0]  %s347, 256, %s349, [#allocation6], 128, 128, 8
    $region69: #{tpu_custom_call.1} parent=1 // pred_fallthru
      _
    // Predicated region
    $region70: #{tpu_custom_call.1} parent=1 // pred_check
      _
    $region71: #{tpu_custom_call.1} parent=1 // pred_check_branch
      %356 = sbr.rel (0) target = $region73
    $region72: #{tpu_custom_call.1} parent=1 // pred_region
      %358 = dma.done [#allocation6], 256
    $region73: #{tpu_custom_call.1} parent=1 // pred_fallthru
      _
    %359 = vsyncpa [#allocation6], 1
  %360 = vsyncmov [#allocation2]
  %s361 = vpop.sfrf %360
  %p362 = scmp.eq.s32.totalorder %s361, 0
  %p363 = pneg %p362
  %365 = shalt.err (%p363)
  %s366 = scalar_lea.sflag [#allocation2], 1
  %367 = vsyncmov %s366
  %s368 = vpop.sfrf %367
  %p369 = scmp.eq.s32.totalorder %s368, 0
  %p370 = pneg %p369
  %372 = shalt.err (%p370)
  %s373 = scalar_lea.sflag [#allocation2], 2
  %374 = vsyncmov %s373
  %s375 = vpop.sfrf %374
  %p376 = scmp.eq.s32.totalorder %s375, 0
  %p377 = pneg %p376
  %379 = shalt.err (%p377)
  %s380 = scalar_lea.sflag [#allocation2], 3
  %381 = vsyncmov %s380
  %s382 = vpop.sfrf %381
  %p383 = scmp.eq.s32.totalorder %s382, 0
  %p384 = pneg %p383
  %386 = shalt.err (%p384)
  %s387 = scalar_lea.sflag [#allocation2], 4
  %388 = vsyncmov %s387
  %s389 = vpop.sfrf %388
  %p390 = scmp.eq.s32.totalorder %s389, 0
  %p391 = pneg %p390
  %393 = shalt.err (%p391)
  %s394 = scalar_lea.sflag [#allocation2], 5
  %395 = vsyncmov %s394
  %s396 = vpop.sfrf %395
  %p397 = scmp.eq.s32.totalorder %s396, 0
  %p398 = pneg %p397
  %400 = shalt.err (%p398)
  %s401 = scalar_lea.sflag [#allocation2], 6
  %402 = vsyncmov %s401
  %s403 = vpop.sfrf %402
  %p404 = scmp.eq.s32.totalorder %s403, 0
  %p405 = pneg %p404
  %407 = shalt.err (%p405)
  %s408 = scalar_lea.sflag [#allocation2], 7
  %409 = vsyncmov %s408
  %s410 = vpop.sfrf %409
  %p411 = scmp.eq.s32.totalorder %s410, 0
  %p412 = pneg %p411
  %414 = shalt.err (%p412)
  %s415 = scalar_lea.sflag [#allocation2], 8
  %416 = vsyncmov %s415
  %s417 = vpop.sfrf %416
  %p418 = scmp.eq.s32.totalorder %s417, 0
  %p419 = pneg %p418
  %421 = shalt.err (%p419)
  %s422 = scalar_lea.sflag [#allocation2], 9
  %423 = vsyncmov %s422
  %s424 = vpop.sfrf %423
  %p425 = scmp.eq.s32.totalorder %s424, 0
  %p426 = pneg %p425
  %428 = shalt.err (%p426)
  %s429 = scalar_lea.sflag [#allocation2], 10
  %430 = vsyncmov %s429
  %s431 = vpop.sfrf %430
  %p432 = scmp.eq.s32.totalorder %s431, 0
  %p433 = pneg %p432
  %435 = shalt.err (%p433)
  %s436 = scalar_lea.sflag [#allocation2], 11
  %437 = vsyncmov %s436
  %s438 = vpop.sfrf %437
  %p439 = scmp.eq.s32.totalorder %s438, 0
  %p440 = pneg %p439
  %442 = shalt.err (%p440)
  %s443 = scalar_lea.sflag [#allocation2], 12
  %444 = vsyncmov %s443
  %s445 = vpop.sfrf %444
  %p446 = scmp.eq.s32.totalorder %s445, 0
  %p447 = pneg %p446
  %449 = shalt.err (%p447)
  %s450 = scalar_lea.sflag [#allocation2], 13
  %451 = vsyncmov %s450
  %s452 = vpop.sfrf %451
  %p453 = scmp.eq.s32.totalorder %s452, 0
  %p454 = pneg %p453
  %456 = shalt.err (%p454)
  %s457 = scalar_lea.sflag [#allocation2], 14
  %458 = vsyncmov %s457
  %s459 = vpop.sfrf %458
  %p460 = scmp.eq.s32.totalorder %s459, 0
  %p461 = pneg %p460
  %463 = shalt.err (%p461)
  %s464 = scalar_lea.sflag [#allocation2], 15
  %465 = vsyncmov %s464
  %s466 = vpop.sfrf %465
  %p467 = scmp.eq.s32.totalorder %s466, 0
  %p468 = pneg %p467
  %470 = shalt.err (%p468)
  %s471 = scalar_lea.sflag [#allocation2], 16
  %472 = vsyncmov %s471
  %s473 = vpop.sfrf %472
  %p474 = scmp.eq.s32.totalorder %s473, 0
  %p475 = pneg %p474
  %477 = shalt.err (%p475)
  %s478 = scalar_lea.sflag [#allocation2], 17
  %479 = vsyncmov %s478
  %s480 = vpop.sfrf %479
  %p481 = scmp.eq.s32.totalorder %s480, 0
  %p482 = pneg %p481
  %484 = shalt.err (%p482)
  %s485 = scalar_lea.sflag [#allocation2], 18
  %486 = vsyncmov %s485
  %s487 = vpop.sfrf %486
  %p488 = scmp.eq.s32.totalorder %s487, 0
  %p489 = pneg %p488
  %491 = shalt.err (%p489)
  %s492 = scalar_lea.sflag [#allocation2], 19
  %493 = vsyncmov %s492
  %s494 = vpop.sfrf %493
  %p495 = scmp.eq.s32.totalorder %s494, 0
  %p496 = pneg %p495
  %498 = shalt.err (%p496)
  %s499 = scalar_lea.sflag [#allocation2], 20
  %500 = vsyncmov %s499
  %s501 = vpop.sfrf %500
  %p502 = scmp.eq.s32.totalorder %s501, 0
  %p503 = pneg %p502
  %505 = shalt.err (%p503)
  %s506 = scalar_lea.sflag [#allocation2], 21
  %507 = vsyncmov %s506
  %s508 = vpop.sfrf %507
  %p509 = scmp.eq.s32.totalorder %s508, 0
  %p510 = pneg %p509
  %512 = shalt.err (%p510)
  %s513 = scalar_lea.sflag [#allocation2], 22
  %514 = vsyncmov %s513
  %s515 = vpop.sfrf %514
  %p516 = scmp.eq.s32.totalorder %s515, 0
  %p517 = pneg %p516
  %519 = shalt.err (%p517)
  %s520 = scalar_lea.sflag [#allocation2], 23
  %521 = vsyncmov %s520
  %s522 = vpop.sfrf %521
  %p523 = scmp.eq.s32.totalorder %s522, 0
  %p524 = pneg %p523
  %526 = shalt.err (%p524)
  %s527 = scalar_lea.sflag [#allocation2], 24
  %528 = vsyncmov %s527
  %s529 = vpop.sfrf %528
  %p530 = scmp.eq.s32.totalorder %s529, 0
  %p531 = pneg %p530
  %533 = shalt.err (%p531)
  %s534 = scalar_lea.sflag [#allocation2], 25
  %535 = vsyncmov %s534
  %s536 = vpop.sfrf %535
  %p537 = scmp.eq.s32.totalorder %s536, 0
  %p538 = pneg %p537
  %540 = shalt.err (%p538)
  %s541 = scalar_lea.sflag [#allocation2], 26
  %542 = vsyncmov %s541
  %s543 = vpop.sfrf %542
  %p544 = scmp.eq.s32.totalorder %s543, 0
  %p545 = pneg %p544
  %547 = shalt.err (%p545)
  %s548 = scalar_lea.sflag [#allocation2], 27
  %549 = vsyncmov %s548
  %s550 = vpop.sfrf %549
  %p551 = scmp.eq.s32.totalorder %s550, 0
  %p552 = pneg %p551
  %554 = shalt.err (%p552)
  %s555 = scalar_lea.sflag [#allocation2], 28
  %556 = vsyncmov %s555
  %s557 = vpop.sfrf %556
  %p558 = scmp.eq.s32.totalorder %s557, 0
  %p559 = pneg %p558
  %561 = shalt.err (%p559)
  %s562 = scalar_lea.sflag [#allocation2], 29
  %563 = vsyncmov %s562
  %s564 = vpop.sfrf %563
  %p565 = scmp.eq.s32.totalorder %s564, 0
  %p566 = pneg %p565
  %568 = shalt.err (%p566)
  %s569 = scalar_lea.sflag [#allocation2], 30
  %570 = vsyncmov %s569
  %s571 = vpop.sfrf %570
  %p572 = scmp.eq.s32.totalorder %s571, 0
  %p573 = pneg %p572
  %575 = shalt.err (%p573)
  %s576 = scalar_lea.sflag [#allocation2], 31
  %577 = vsyncmov %s576
  %s578 = vpop.sfrf %577
  %p579 = scmp.eq.s32.totalorder %s578, 0
  %p580 = pneg %p579
  %582 = shalt.err (%p580)
  %s583 = scalar_lea.sflag [#allocation2], 32
  %584 = vsyncmov %s583
  %s585 = vpop.sfrf %584
  %p586 = scmp.eq.s32.totalorder %s585, 0
  %p587 = pneg %p586
  %589 = shalt.err (%p587)
  %s590 = scalar_lea.sflag [#allocation2], 33
  %591 = vsyncmov %s590
  %s592 = vpop.sfrf %591
  %p593 = scmp.eq.s32.totalorder %s592, 0
  %p594 = pneg %p593
  %596 = shalt.err (%p594)
  %s597 = scalar_lea.sflag [#allocation2], 34
  %598 = vsyncmov %s597
  %s599 = vpop.sfrf %598
  %p600 = scmp.eq.s32.totalorder %s599, 0
  %p601 = pneg %p600
  %603 = shalt.err (%p601)
  %s604 = scalar_lea.sflag [#allocation2], 35
  %605 = vsyncmov %s604
  %s606 = vpop.sfrf %605
  %p607 = scmp.eq.s32.totalorder %s606, 0
  %p608 = pneg %p607
  %610 = shalt.err (%p608)
  %s611 = scalar_lea.sflag [#allocation2], 36
  %612 = vsyncmov %s611
  %s613 = vpop.sfrf %612
  %p614 = scmp.eq.s32.totalorder %s613, 0
  %p615 = pneg %p614
  %617 = shalt.err (%p615)
  %s618 = scalar_lea.sflag [#allocation2], 37
  %619 = vsyncmov %s618
  %s620 = vpop.sfrf %619
  %p621 = scmp.eq.s32.totalorder %s620, 0
  %p622 = pneg %p621
  %624 = shalt.err (%p622)
  %s625 = scalar_lea.sflag [#allocation2], 38
  %626 = vsyncmov %s625
  %s627 = vpop.sfrf %626
  %p628 = scmp.eq.s32.totalorder %s627, 0
  %p629 = pneg %p628
  %631 = shalt.err (%p629)
  %s632 = scalar_lea.sflag [#allocation2], 39
  %633 = vsyncmov %s632
  %s634 = vpop.sfrf %633
  %p635 = scmp.eq.s32.totalorder %s634, 0
  %p636 = pneg %p635
  %638 = shalt.err (%p636)
  %s639 = scalar_lea.sflag [#allocation2], 40
  %640 = vsyncmov %s639
  %s641 = vpop.sfrf %640
  %p642 = scmp.eq.s32.totalorder %s641, 0
  %p643 = pneg %p642
  %645 = shalt.err (%p643)
  %s646 = scalar_lea.sflag [#allocation2], 41
  %647 = vsyncmov %s646
  %s648 = vpop.sfrf %647
  %p649 = scmp.eq.s32.totalorder %s648, 0
  %p650 = pneg %p649
  %652 = shalt.err (%p650)
  %s653 = scalar_lea.sflag [#allocation2], 42
  %654 = vsyncmov %s653
  %s655 = vpop.sfrf %654
  %p656 = scmp.eq.s32.totalorder %s655, 0
  %p657 = pneg %p656
  %659 = shalt.err (%p657)
  %s660 = scalar_lea.sflag [#allocation2], 43
  %661 = vsyncmov %s660
  %s662 = vpop.sfrf %661
  %p663 = scmp.eq.s32.totalorder %s662, 0
  %p664 = pneg %p663
  %666 = shalt.err (%p664)
  %s667 = scalar_lea.sflag [#allocation2], 44
  %668 = vsyncmov %s667
  %s669 = vpop.sfrf %668
  %p670 = scmp.eq.s32.totalorder %s669, 0
  %p671 = pneg %p670
  %673 = shalt.err (%p671)
  %s674 = scalar_lea.sflag [#allocation2], 45
  %675 = vsyncmov %s674
  %s676 = vpop.sfrf %675
  %p677 = scmp.eq.s32.totalorder %s676, 0
  %p678 = pneg %p677
  %680 = shalt.err (%p678)
  %s681 = scalar_lea.sflag [#allocation2], 46
  %682 = vsyncmov %s681
  %s683 = vpop.sfrf %682
  %p684 = scmp.eq.s32.totalorder %s683, 0
  %p685 = pneg %p684
  %687 = shalt.err (%p685)
  %s688 = scalar_lea.sflag [#allocation2], 47
  %689 = vsyncmov %s688
  %s690 = vpop.sfrf %689
  %p691 = scmp.eq.s32.totalorder %s690, 0
  %p692 = pneg %p691
  %694 = shalt.err (%p692)
  %s695 = scalar_lea.sflag [#allocation2], 48
  %696 = vsyncmov %s695
  %s697 = vpop.sfrf %696
  %p698 = scmp.eq.s32.totalorder %s697, 0
  %p699 = pneg %p698
  %701 = shalt.err (%p699)
  %s702 = scalar_lea.sflag [#allocation2], 49
  %703 = vsyncmov %s702
  %s704 = vpop.sfrf %703
  %p705 = scmp.eq.s32.totalorder %s704, 0
  %p706 = pneg %p705
  %708 = shalt.err (%p706)
  %s709 = scalar_lea.sflag [#allocation2], 50
  %710 = vsyncmov %s709
  %s711 = vpop.sfrf %710
  %p712 = scmp.eq.s32.totalorder %s711, 0
  %p713 = pneg %p712
  %715 = shalt.err (%p713)
  %s716 = scalar_lea.sflag [#allocation2], 51
  %717 = vsyncmov %s716
  %s718 = vpop.sfrf %717
  %p719 = scmp.eq.s32.totalorder %s718, 0
  %p720 = pneg %p719
  %722 = shalt.err (%p720)
  %s723 = scalar_lea.sflag [#allocation2], 52
  %724 = vsyncmov %s723
  %s725 = vpop.sfrf %724
  %p726 = scmp.eq.s32.totalorder %s725, 0
  %p727 = pneg %p726
  %729 = shalt.err (%p727)
  %s730 = scalar_lea.sflag [#allocation2], 53
  %731 = vsyncmov %s730
  %s732 = vpop.sfrf %731
  %p733 = scmp.eq.s32.totalorder %s732, 0
  %p734 = pneg %p733
  %736 = shalt.err (%p734)
  %s737 = scalar_lea.sflag [#allocation2], 54
  %738 = vsyncmov %s737
  %s739 = vpop.sfrf %738
  %p740 = scmp.eq.s32.totalorder %s739, 0
  %p741 = pneg %p740
  %743 = shalt.err (%p741)
  %s744 = scalar_lea.sflag [#allocation2], 55
  %745 = vsyncmov %s744
  %s746 = vpop.sfrf %745
  %p747 = scmp.eq.s32.totalorder %s746, 0
  %p748 = pneg %p747
  %750 = shalt.err (%p748)
  %s751 = scalar_lea.sflag [#allocation2], 56
  %752 = vsyncmov %s751
  %s753 = vpop.sfrf %752
  %p754 = scmp.eq.s32.totalorder %s753, 0
  %p755 = pneg %p754
  %757 = shalt.err (%p755)
  %s758 = scalar_lea.sflag [#allocation2], 57
  %759 = vsyncmov %s758
  %s760 = vpop.sfrf %759
  %p761 = scmp.eq.s32.totalorder %s760, 0
  %p762 = pneg %p761
  %764 = shalt.err (%p762)
  %s765 = scalar_lea.sflag [#allocation2], 58
  %766 = vsyncmov %s765
  %s767 = vpop.sfrf %766
  %p768 = scmp.eq.s32.totalorder %s767, 0
  %p769 = pneg %p768
  %771 = shalt.err (%p769)
  %s772 = scalar_lea.sflag [#allocation2], 59
  %773 = vsyncmov %s772
  %s774 = vpop.sfrf %773
  %p775 = scmp.eq.s32.totalorder %s774, 0
  %p776 = pneg %p775
  %778 = shalt.err (%p776)
  %s779 = scalar_lea.sflag [#allocation2], 60
  %780 = vsyncmov %s779
  %s781 = vpop.sfrf %780
  %p782 = scmp.eq.s32.totalorder %s781, 0
  %p783 = pneg %p782
  %785 = shalt.err (%p783)
  %s786 = scalar_lea.sflag [#allocation2], 61
  %787 = vsyncmov %s786
  %s788 = vpop.sfrf %787
  %p789 = scmp.eq.s32.totalorder %s788, 0
  %p790 = pneg %p789
  %792 = shalt.err (%p790)
  %s793 = scalar_lea.sflag [#allocation2], 62
  %794 = vsyncmov %s793
  %s795 = vpop.sfrf %794
  %p796 = scmp.eq.s32.totalorder %s795, 0
  %p797 = pneg %p796
  %799 = shalt.err (%p797)
  %s800 = scalar_lea.sflag [#allocation2], 63
  %801 = vsyncmov %s800
  %s802 = vpop.sfrf %801
  %p803 = scmp.eq.s32.totalorder %s802, 0
  %p804 = pneg %p803
  %806 = shalt.err (%p804)

</llo_original>
